<compile_context>
chip_gen: v6e
topology: v6e:2x2x1
jax: 0.10.0
libtpu: 0.0.40
codegen_flags: <defaults>
</compile_context>

<pallas_src>
import jax
import jax.numpy as jnp
from jax.experimental import pallas as pl
from jax.experimental.pallas import tpu as pltpu

LANE = 128  # lane-dense output width


def pred_net_kernel(x_ref, embw_ref, w2_ref, wi_ref, wh_ref, wout_ref,
                    bias_ref, h0_ref, out_ref):
    T, B = x_ref.shape
    H = h0_ref.shape[1]

    # --- embedding MLP: Linear(1->H/2)+sigmoid, Linear(H/2->H)+sigmoid ---
    # input_size == 1, so Linear(1, E) is a broadcast multiply (no K=1 matmul).
    xs = x_ref[...].reshape(T * B, 1)                      # (T*B, 1)
    w1 = embw_ref[0:1, :]                                  # (1, E)
    b1 = embw_ref[1:2, :]                                  # (1, E)
    f1 = jax.nn.sigmoid(xs * w1 + b1)                      # (T*B, E)

    b2 = bias_ref[0:1, 0:H]                                # (1, H)
    f2 = jax.nn.sigmoid(
        jnp.dot(f1, w2_ref[...], preferred_element_type=jnp.float32) + b2)
    # dropout(p=0.0) is the identity.

    # --- hoisted input-side gate projections: one (T*B, 3H) matmul ---
    bi = bias_ref[1:2, 0:3 * H]                            # (1, 3H)
    gi_all = jnp.dot(f2, wi_ref[...],
                     preferred_element_type=jnp.float32) + bi   # (T*B, 3H)

    # --- GRU recurrence (PyTorch gate order r, z, n), fully unrolled ---
    wh = wh_ref[...]                                       # (H, 3H)
    bh = bias_ref[2:3, 0:3 * H]                            # (1, 3H)
    h = h0_ref[...]                                        # (B, H)
    for t in range(T):                                     # T static & small
        gi = gi_all[t * B:(t + 1) * B, :]                  # (B, 3H) static slice
        gh = jnp.dot(h, wh, preferred_element_type=jnp.float32) + bh
        # one EUP sigmoid for both r and z
        rz = jax.nn.sigmoid(gi[:, 0:2 * H] + gh[:, 0:2 * H])
        r = rz[:, 0:H]
        z = rz[:, H:2 * H]
        n = jnp.tanh(gi[:, 2 * H:3 * H] + r * gh[:, 2 * H:3 * H])
        h = (1.0 - z) * n + z * h

    # --- output head: Linear(H -> obs_len), lane-dense (padded to 128) ---
    bout = bias_ref[3:4, :]                                # (1, LANE)
    out_ref[...] = jnp.dot(h, wout_ref[...],
                           preferred_element_type=jnp.float32) + bout


def pack_params(params):
    """Pack the 19 tiny parameter arrays into 6 wider ones."""
    H = params["w2"].shape[1]
    obs_len = params["wout"].shape[1]

    embw = jnp.concatenate([params["w1"], params["b1"]], axis=0)          # (2, E)
    wi_all = jnp.concatenate([params["wir"], params["wiz"], params["win"]],
                             axis=1)                                      # (H, 3H)
    wh_all = jnp.concatenate([params["whr"], params["whz"], params["whn"]],
                             axis=1)                                      # (H, 3H)
    bi_all = jnp.concatenate([params["bir"], params["biz"], params["bin"]],
                             axis=1)                                      # (1, 3H)
    bh_all = jnp.concatenate([params["bhr"], params["bhz"], params["bhn"]],
                             axis=1)                                      # (1, 3H)

    wout_pad = jnp.zeros((H, LANE), jnp.float32).at[:, :obs_len].set(params["wout"])

    def pad_row(row):
        return jnp.zeros((1, LANE), jnp.float32).at[:, :row.shape[1]].set(row)

    bias_pack = jnp.concatenate(
        [pad_row(params["b2"]), pad_row(bi_all), pad_row(bh_all),
         pad_row(params["bout"])], axis=0)                                # (4, LANE)

    return embw, params["w2"], wi_all, wh_all, wout_pad, bias_pack


def pred_net_forward(x, params, h0):
    """x: (B, T, F) float32; h0: (1, B, H) float32 (stand-in for torch.randn h0)."""
    B, T, _ = x.shape
    obs_len = params["wout"].shape[1]

    x_tm = jnp.transpose(x[:, :, 0], (1, 0))               # (T, B) time-major
    embw, w2, wi_all, wh_all, wout_pad, bias_pack = pack_params(params)
    args = (x_tm, embw, w2, wi_all, wh_all, wout_pad, bias_pack, h0[0])

    vmem = pl.BlockSpec(memory_space=pltpu.MemorySpace.VMEM)
    out_pad = pl.pallas_call(
        pred_net_kernel,
        out_shape=jax.ShapeDtypeStruct((B, LANE), jnp.float32),
        in_specs=[vmem] * len(args),
        out_specs=vmem,
    )(*args)

    out = out_pad[:, :obs_len]                             # (B, obs_len)
    # self.output(h0) has shape (1, B, obs_len); then .reshape(1, obs_len, 1)
    # (exactly like the PyTorch module, this requires B == 1).
    output_sf = out[None, :, :]
    output = output_sf.reshape(output_sf.shape[0], output_sf.shape[2], 1)
    return output


def init_params(key, obs_len, H=32):
    E = H // 2
    keys = jax.random.split(key, 18)

    def u(k, shape, fan_in):
        bound = 1.0 / jnp.sqrt(jnp.float32(fan_in))
        return jax.random.uniform(k, shape, jnp.float32, -bound, bound)

    return {
        "w1": u(keys[0], (1, E), 1),   "b1": u(keys[1], (1, E), 1),
        "w2": u(keys[2], (E, H), E),   "b2": u(keys[3], (1, H), E),
        "wir": u(keys[4], (H, H), H),  "wiz": u(keys[5], (H, H), H),  "win": u(keys[6], (H, H), H),
        "whr": u(keys[7], (H, H), H),  "whz": u(keys[8], (H, H), H),  "whn": u(keys[9], (H, H), H),
        "bir": u(keys[10], (1, H), H), "biz": u(keys[11], (1, H), H), "bin": u(keys[12], (1, H), H),
        "bhr": u(keys[13], (1, H), H), "bhz": u(keys[14], (1, H), H), "bhn": u(keys[15], (1, H), H),
        "wout": u(keys[16], (H, obs_len), H), "bout": u(keys[17], (1, obs_len), H),
    }


def reference_forward(x, params, h0):
    """Pure-JAX reference matching the PyTorch forward (dropout p=0)."""
    f = x[:, :, 0:1]                                       # (B, T, 1)
    f1 = jax.nn.sigmoid(f @ params["w1"] + params["b1"])
    f2 = jax.nn.sigmoid(f1 @ params["w2"] + params["b2"])  # (B, T, H)
    h = h0[0]
    T = f2.shape[1]
    for t in range(T):
        x_t = f2[:, t, :]
        r = jax.nn.sigmoid(x_t @ params["wir"] + params["bir"] + h @ params["whr"] + params["bhr"])
        z = jax.nn.sigmoid(x_t @ params["wiz"] + params["biz"] + h @ params["whz"] + params["bhz"])
        n = jnp.tanh(x_t @ params["win"] + params["bin"] + r * (h @ params["whn"] + params["bhn"]))
        h = (1.0 - z) * n + z * h
    out_sf = (h @ params["wout"] + params["bout"])[None]   # (1, B, obs_len)
    return out_sf.reshape(out_sf.shape[0], out_sf.shape[2], 1)


if __name__ == "__main__":
    obs_len, pred_len = 8, 8
    B, T, F, H = 1, obs_len, 2, 32   # B must be 1 (the module's reshape requires it)

    key = jax.random.PRNGKey(0)
    k_x, k_h0, k_p = jax.random.split(key, 3)

    x = jax.random.normal(k_x, (B, T, F), jnp.float32)
    # TODO(synk): torch.randn(1, B, H) h0 is in-forward RNG; generated
    # deterministically outside the kernel and passed in.
    h0 = jax.random.normal(k_h0, (1, B, H), jnp.float32)
    params = init_params(k_p, obs_len, H)

    out = pred_net_forward(x, params, h0)
    out = jax.block_until_ready(out)

    ref = reference_forward(x, params, h0)
    assert out.shape == (1, obs_len, 1), out.shape
    assert jnp.allclose(out, ref, atol=1e-5, rtol=1e-5), (out, ref)

    print("KERNEL_OK")
</pallas_src>

<mosaic_0001>
module attributes {stable_mosaic.version = 11 : i64} {
  func.func @pred_net_kernel(%arg0: memref<8x1xf32, #tpu.memory_space<vmem>>, %arg1: memref<2x16xf32, #tpu.memory_space<vmem>>, %arg2: memref<16x32xf32, #tpu.memory_space<vmem>>, %arg3: memref<32x96xf32, #tpu.memory_space<vmem>>, %arg4: memref<32x96xf32, #tpu.memory_space<vmem>>, %arg5: memref<32x128xf32, #tpu.memory_space<vmem>>, %arg6: memref<4x128xf32, #tpu.memory_space<vmem>>, %arg7: memref<1x32xf32, #tpu.memory_space<vmem>>, %arg8: memref<1x128xf32, #tpu.memory_space<vmem>>) attributes {dimension_semantics = [], scalar_prefetch = 0 : i64, scratch_operands = 0 : i64, tpu.core_type = #tpu.core_type<tc>} {
    %c0 = arith.constant 0 : index
    %c0_0 = arith.constant 0 : index
    %0 = vector.load %arg0[%c0, %c0_0] : memref<8x1xf32, #tpu.memory_space<vmem>>, vector<8x1xf32>
    %c0_1 = arith.constant 0 : index
    %c0_2 = arith.constant 0 : index
    %1 = vector.load %arg1[%c0_1, %c0_2] : memref<2x16xf32, #tpu.memory_space<vmem>>, vector<1x16xf32>
    %c1 = arith.constant 1 : index
    %c0_3 = arith.constant 0 : index
    %2 = vector.load %arg1[%c1, %c0_3] : memref<2x16xf32, #tpu.memory_space<vmem>>, vector<1x16xf32>
    %3 = vector.broadcast %0 : vector<8x1xf32> to vector<8x16xf32>
    %4 = vector.broadcast %1 : vector<1x16xf32> to vector<8x16xf32>
    %5 = arith.mulf %3, %4 : vector<8x16xf32>
    %6 = vector.broadcast %2 : vector<1x16xf32> to vector<8x16xf32>
    %7 = arith.addf %5, %6 : vector<8x16xf32>
    %8 = arith.negf %7 : vector<8x16xf32>
    %9 = math.exp %8 : vector<8x16xf32>
    %cst = arith.constant 1.000000e+00 : f32
    %10 = vector.broadcast %cst : f32 to vector<8x16xf32>
    %11 = arith.addf %10, %9 : vector<8x16xf32>
    %12 = arith.divf %10, %11 : vector<8x16xf32>
    %c0_4 = arith.constant 0 : index
    %c0_5 = arith.constant 0 : index
    %13 = vector.load %arg6[%c0_4, %c0_5] : memref<4x128xf32, #tpu.memory_space<vmem>>, vector<1x32xf32>
    %c0_6 = arith.constant 0 : index
    %c0_7 = arith.constant 0 : index
    %14 = vector.load %arg2[%c0_6, %c0_7] : memref<16x32xf32, #tpu.memory_space<vmem>>, vector<16x32xf32>
    %cst_8 = arith.constant dense<0.000000e+00> : vector<8x32xf32>
    %15 = tpu.matmul %12, %14, %cst_8 {dimension_numbers = #tpu.dot_dimension_numbers<[1], [0], [0], [1], [0, 0, 1, 1], [], []>} : vector<8x16xf32>, vector<16x32xf32>, vector<8x32xf32> -> vector<8x32xf32>
    %16 = vector.broadcast %13 : vector<1x32xf32> to vector<8x32xf32>
    %17 = arith.addf %15, %16 : vector<8x32xf32>
    %18 = arith.negf %17 : vector<8x32xf32>
    %19 = math.exp %18 : vector<8x32xf32>
    %cst_9 = arith.constant 1.000000e+00 : f32
    %20 = vector.broadcast %cst_9 : f32 to vector<8x32xf32>
    %21 = arith.addf %20, %19 : vector<8x32xf32>
    %22 = arith.divf %20, %21 : vector<8x32xf32>
    %c1_10 = arith.constant 1 : index
    %c0_11 = arith.constant 0 : index
    %23 = vector.load %arg6[%c1_10, %c0_11] : memref<4x128xf32, #tpu.memory_space<vmem>>, vector<1x96xf32>
    %c0_12 = arith.constant 0 : index
    %c0_13 = arith.constant 0 : index
    %24 = vector.load %arg3[%c0_12, %c0_13] : memref<32x96xf32, #tpu.memory_space<vmem>>, vector<32x96xf32>
    %cst_14 = arith.constant dense<0.000000e+00> : vector<8x96xf32>
    %25 = tpu.matmul %22, %24, %cst_14 {dimension_numbers = #tpu.dot_dimension_numbers<[1], [0], [0], [1], [0, 0, 1, 1], [], []>} : vector<8x32xf32>, vector<32x96xf32>, vector<8x96xf32> -> vector<8x96xf32>
    %26 = vector.broadcast %23 : vector<1x96xf32> to vector<8x96xf32>
    %27 = arith.addf %25, %26 : vector<8x96xf32>
    %c0_15 = arith.constant 0 : index
    %c0_16 = arith.constant 0 : index
    %28 = vector.load %arg4[%c0_15, %c0_16] : memref<32x96xf32, #tpu.memory_space<vmem>>, vector<32x96xf32>
    %c2 = arith.constant 2 : index
    %c0_17 = arith.constant 0 : index
    %29 = vector.load %arg6[%c2, %c0_17] : memref<4x128xf32, #tpu.memory_space<vmem>>, vector<1x96xf32>
    %c0_18 = arith.constant 0 : index
    %c0_19 = arith.constant 0 : index
    %30 = vector.load %arg7[%c0_18, %c0_19] : memref<1x32xf32, #tpu.memory_space<vmem>>, vector<1x32xf32>
    %31 = vector.extract_strided_slice %27 {offsets = [0, 0], sizes = [1, 96], strides = [1, 1]} : vector<8x96xf32> to vector<1x96xf32>
    %cst_20 = arith.constant dense<0.000000e+00> : vector<1x96xf32>
    %32 = tpu.matmul %30, %28, %cst_20 {dimension_numbers = #tpu.dot_dimension_numbers<[1], [0], [0], [1], [0, 0, 1, 1], [], []>} : vector<1x32xf32>, vector<32x96xf32>, vector<1x96xf32> -> vector<1x96xf32>
    %33 = arith.addf %32, %29 : vector<1x96xf32>
    %34 = vector.extract_strided_slice %31 {offsets = [0, 0], sizes = [1, 64], strides = [1, 1]} : vector<1x96xf32> to vector<1x64xf32>
    %35 = vector.extract_strided_slice %33 {offsets = [0, 0], sizes = [1, 64], strides = [1, 1]} : vector<1x96xf32> to vector<1x64xf32>
    %36 = arith.addf %34, %35 : vector<1x64xf32>
    %37 = arith.negf %36 : vector<1x64xf32>
    %38 = math.exp %37 : vector<1x64xf32>
    %cst_21 = arith.constant 1.000000e+00 : f32
    %39 = vector.broadcast %cst_21 : f32 to vector<1x64xf32>
    %40 = arith.addf %39, %38 : vector<1x64xf32>
    %41 = arith.divf %39, %40 : vector<1x64xf32>
    %42 = vector.extract_strided_slice %41 {offsets = [0, 0], sizes = [1, 32], strides = [1, 1]} : vector<1x64xf32> to vector<1x32xf32>
    %43 = vector.extract_strided_slice %41 {offsets = [0, 32], sizes = [1, 32], strides = [1, 1]} : vector<1x64xf32> to vector<1x32xf32>
    %44 = vector.extract_strided_slice %31 {offsets = [0, 64], sizes = [1, 32], strides = [1, 1]} : vector<1x96xf32> to vector<1x32xf32>
    %45 = vector.extract_strided_slice %33 {offsets = [0, 64], sizes = [1, 32], strides = [1, 1]} : vector<1x96xf32> to vector<1x32xf32>
    %46 = arith.mulf %42, %45 : vector<1x32xf32>
    %47 = arith.addf %44, %46 : vector<1x32xf32>
    %48 = math.tanh %47 : vector<1x32xf32>
    %cst_22 = arith.constant 1.000000e+00 : f32
    %49 = vector.broadcast %cst_22 : f32 to vector<1x32xf32>
    %50 = arith.subf %49, %43 : vector<1x32xf32>
    %51 = arith.mulf %50, %48 : vector<1x32xf32>
    %52 = arith.mulf %43, %30 : vector<1x32xf32>
    %53 = arith.addf %51, %52 : vector<1x32xf32>
    %54 = vector.extract_strided_slice %27 {offsets = [1, 0], sizes = [1, 96], strides = [1, 1]} : vector<8x96xf32> to vector<1x96xf32>
    %cst_23 = arith.constant dense<0.000000e+00> : vector<1x96xf32>
    %55 = tpu.matmul %53, %28, %cst_23 {dimension_numbers = #tpu.dot_dimension_numbers<[1], [0], [0], [1], [0, 0, 1, 1], [], []>} : vector<1x32xf32>, vector<32x96xf32>, vector<1x96xf32> -> vector<1x96xf32>
    %56 = arith.addf %55, %29 : vector<1x96xf32>
    %57 = vector.extract_strided_slice %54 {offsets = [0, 0], sizes = [1, 64], strides = [1, 1]} : vector<1x96xf32> to vector<1x64xf32>
    %58 = vector.extract_strided_slice %56 {offsets = [0, 0], sizes = [1, 64], strides = [1, 1]} : vector<1x96xf32> to vector<1x64xf32>
    %59 = arith.addf %57, %58 : vector<1x64xf32>
    %60 = arith.negf %59 : vector<1x64xf32>
    %61 = math.exp %60 : vector<1x64xf32>
    %cst_24 = arith.constant 1.000000e+00 : f32
    %62 = vector.broadcast %cst_24 : f32 to vector<1x64xf32>
    %63 = arith.addf %62, %61 : vector<1x64xf32>
    %64 = arith.divf %62, %63 : vector<1x64xf32>
    %65 = vector.extract_strided_slice %64 {offsets = [0, 0], sizes = [1, 32], strides = [1, 1]} : vector<1x64xf32> to vector<1x32xf32>
    %66 = vector.extract_strided_slice %64 {offsets = [0, 32], sizes = [1, 32], strides = [1, 1]} : vector<1x64xf32> to vector<1x32xf32>
    %67 = vector.extract_strided_slice %54 {offsets = [0, 64], sizes = [1, 32], strides = [1, 1]} : vector<1x96xf32> to vector<1x32xf32>
    %68 = vector.extract_strided_slice %56 {offsets = [0, 64], sizes = [1, 32], strides = [1, 1]} : vector<1x96xf32> to vector<1x32xf32>
    %69 = arith.mulf %65, %68 : vector<1x32xf32>
    %70 = arith.addf %67, %69 : vector<1x32xf32>
    %71 = math.tanh %70 : vector<1x32xf32>
    %cst_25 = arith.constant 1.000000e+00 : f32
    %72 = vector.broadcast %cst_25 : f32 to vector<1x32xf32>
    %73 = arith.subf %72, %66 : vector<1x32xf32>
    %74 = arith.mulf %73, %71 : vector<1x32xf32>
    %75 = arith.mulf %66, %53 : vector<1x32xf32>
    %76 = arith.addf %74, %75 : vector<1x32xf32>
    %77 = vector.extract_strided_slice %27 {offsets = [2, 0], sizes = [1, 96], strides = [1, 1]} : vector<8x96xf32> to vector<1x96xf32>
    %cst_26 = arith.constant dense<0.000000e+00> : vector<1x96xf32>
    %78 = tpu.matmul %76, %28, %cst_26 {dimension_numbers = #tpu.dot_dimension_numbers<[1], [0], [0], [1], [0, 0, 1, 1], [], []>} : vector<1x32xf32>, vector<32x96xf32>, vector<1x96xf32> -> vector<1x96xf32>
    %79 = arith.addf %78, %29 : vector<1x96xf32>
    %80 = vector.extract_strided_slice %77 {offsets = [0, 0], sizes = [1, 64], strides = [1, 1]} : vector<1x96xf32> to vector<1x64xf32>
    %81 = vector.extract_strided_slice %79 {offsets = [0, 0], sizes = [1, 64], strides = [1, 1]} : vector<1x96xf32> to vector<1x64xf32>
    %82 = arith.addf %80, %81 : vector<1x64xf32>
    %83 = arith.negf %82 : vector<1x64xf32>
    %84 = math.exp %83 : vector<1x64xf32>
    %cst_27 = arith.constant 1.000000e+00 : f32
    %85 = vector.broadcast %cst_27 : f32 to vector<1x64xf32>
    %86 = arith.addf %85, %84 : vector<1x64xf32>
    %87 = arith.divf %85, %86 : vector<1x64xf32>
    %88 = vector.extract_strided_slice %87 {offsets = [0, 0], sizes = [1, 32], strides = [1, 1]} : vector<1x64xf32> to vector<1x32xf32>
    %89 = vector.extract_strided_slice %87 {offsets = [0, 32], sizes = [1, 32], strides = [1, 1]} : vector<1x64xf32> to vector<1x32xf32>
    %90 = vector.extract_strided_slice %77 {offsets = [0, 64], sizes = [1, 32], strides = [1, 1]} : vector<1x96xf32> to vector<1x32xf32>
    %91 = vector.extract_strided_slice %79 {offsets = [0, 64], sizes = [1, 32], strides = [1, 1]} : vector<1x96xf32> to vector<1x32xf32>
    %92 = arith.mulf %88, %91 : vector<1x32xf32>
    %93 = arith.addf %90, %92 : vector<1x32xf32>
    %94 = math.tanh %93 : vector<1x32xf32>
    %cst_28 = arith.constant 1.000000e+00 : f32
    %95 = vector.broadcast %cst_28 : f32 to vector<1x32xf32>
    %96 = arith.subf %95, %89 : vector<1x32xf32>
    %97 = arith.mulf %96, %94 : vector<1x32xf32>
    %98 = arith.mulf %89, %76 : vector<1x32xf32>
    %99 = arith.addf %97, %98 : vector<1x32xf32>
    %100 = vector.extract_strided_slice %27 {offsets = [3, 0], sizes = [1, 96], strides = [1, 1]} : vector<8x96xf32> to vector<1x96xf32>
    %cst_29 = arith.constant dense<0.000000e+00> : vector<1x96xf32>
    %101 = tpu.matmul %99, %28, %cst_29 {dimension_numbers = #tpu.dot_dimension_numbers<[1], [0], [0], [1], [0, 0, 1, 1], [], []>} : vector<1x32xf32>, vector<32x96xf32>, vector<1x96xf32> -> vector<1x96xf32>
    %102 = arith.addf %101, %29 : vector<1x96xf32>
    %103 = vector.extract_strided_slice %100 {offsets = [0, 0], sizes = [1, 64], strides = [1, 1]} : vector<1x96xf32> to vector<1x64xf32>
    %104 = vector.extract_strided_slice %102 {offsets = [0, 0], sizes = [1, 64], strides = [1, 1]} : vector<1x96xf32> to vector<1x64xf32>
    %105 = arith.addf %103, %104 : vector<1x64xf32>
    %106 = arith.negf %105 : vector<1x64xf32>
    %107 = math.exp %106 : vector<1x64xf32>
    %cst_30 = arith.constant 1.000000e+00 : f32
    %108 = vector.broadcast %cst_30 : f32 to vector<1x64xf32>
    %109 = arith.addf %108, %107 : vector<1x64xf32>
    %110 = arith.divf %108, %109 : vector<1x64xf32>
    %111 = vector.extract_strided_slice %110 {offsets = [0, 0], sizes = [1, 32], strides = [1, 1]} : vector<1x64xf32> to vector<1x32xf32>
    %112 = vector.extract_strided_slice %110 {offsets = [0, 32], sizes = [1, 32], strides = [1, 1]} : vector<1x64xf32> to vector<1x32xf32>
    %113 = vector.extract_strided_slice %100 {offsets = [0, 64], sizes = [1, 32], strides = [1, 1]} : vector<1x96xf32> to vector<1x32xf32>
    %114 = vector.extract_strided_slice %102 {offsets = [0, 64], sizes = [1, 32], strides = [1, 1]} : vector<1x96xf32> to vector<1x32xf32>
    %115 = arith.mulf %111, %114 : vector<1x32xf32>
    %116 = arith.addf %113, %115 : vector<1x32xf32>
    %117 = math.tanh %116 : vector<1x32xf32>
    %cst_31 = arith.constant 1.000000e+00 : f32
    %118 = vector.broadcast %cst_31 : f32 to vector<1x32xf32>
    %119 = arith.subf %118, %112 : vector<1x32xf32>
    %120 = arith.mulf %119, %117 : vector<1x32xf32>
    %121 = arith.mulf %112, %99 : vector<1x32xf32>
    %122 = arith.addf %120, %121 : vector<1x32xf32>
    %123 = vector.extract_strided_slice %27 {offsets = [4, 0], sizes = [1, 96], strides = [1, 1]} : vector<8x96xf32> to vector<1x96xf32>
    %cst_32 = arith.constant dense<0.000000e+00> : vector<1x96xf32>
    %124 = tpu.matmul %122, %28, %cst_32 {dimension_numbers = #tpu.dot_dimension_numbers<[1], [0], [0], [1], [0, 0, 1, 1], [], []>} : vector<1x32xf32>, vector<32x96xf32>, vector<1x96xf32> -> vector<1x96xf32>
    %125 = arith.addf %124, %29 : vector<1x96xf32>
    %126 = vector.extract_strided_slice %123 {offsets = [0, 0], sizes = [1, 64], strides = [1, 1]} : vector<1x96xf32> to vector<1x64xf32>
    %127 = vector.extract_strided_slice %125 {offsets = [0, 0], sizes = [1, 64], strides = [1, 1]} : vector<1x96xf32> to vector<1x64xf32>
    %128 = arith.addf %126, %127 : vector<1x64xf32>
    %129 = arith.negf %128 : vector<1x64xf32>
    %130 = math.exp %129 : vector<1x64xf32>
    %cst_33 = arith.constant 1.000000e+00 : f32
    %131 = vector.broadcast %cst_33 : f32 to vector<1x64xf32>
    %132 = arith.addf %131, %130 : vector<1x64xf32>
    %133 = arith.divf %131, %132 : vector<1x64xf32>
    %134 = vector.extract_strided_slice %133 {offsets = [0, 0], sizes = [1, 32], strides = [1, 1]} : vector<1x64xf32> to vector<1x32xf32>
    %135 = vector.extract_strided_slice %133 {offsets = [0, 32], sizes = [1, 32], strides = [1, 1]} : vector<1x64xf32> to vector<1x32xf32>
    %136 = vector.extract_strided_slice %123 {offsets = [0, 64], sizes = [1, 32], strides = [1, 1]} : vector<1x96xf32> to vector<1x32xf32>
    %137 = vector.extract_strided_slice %125 {offsets = [0, 64], sizes = [1, 32], strides = [1, 1]} : vector<1x96xf32> to vector<1x32xf32>
    %138 = arith.mulf %134, %137 : vector<1x32xf32>
    %139 = arith.addf %136, %138 : vector<1x32xf32>
    %140 = math.tanh %139 : vector<1x32xf32>
    %cst_34 = arith.constant 1.000000e+00 : f32
    %141 = vector.broadcast %cst_34 : f32 to vector<1x32xf32>
    %142 = arith.subf %141, %135 : vector<1x32xf32>
    %143 = arith.mulf %142, %140 : vector<1x32xf32>
    %144 = arith.mulf %135, %122 : vector<1x32xf32>
    %145 = arith.addf %143, %144 : vector<1x32xf32>
    %146 = vector.extract_strided_slice %27 {offsets = [5, 0], sizes = [1, 96], strides = [1, 1]} : vector<8x96xf32> to vector<1x96xf32>
    %cst_35 = arith.constant dense<0.000000e+00> : vector<1x96xf32>
    %147 = tpu.matmul %145, %28, %cst_35 {dimension_numbers = #tpu.dot_dimension_numbers<[1], [0], [0], [1], [0, 0, 1, 1], [], []>} : vector<1x32xf32>, vector<32x96xf32>, vector<1x96xf32> -> vector<1x96xf32>
    %148 = arith.addf %147, %29 : vector<1x96xf32>
    %149 = vector.extract_strided_slice %146 {offsets = [0, 0], sizes = [1, 64], strides = [1, 1]} : vector<1x96xf32> to vector<1x64xf32>
    %150 = vector.extract_strided_slice %148 {offsets = [0, 0], sizes = [1, 64], strides = [1, 1]} : vector<1x96xf32> to vector<1x64xf32>
    %151 = arith.addf %149, %150 : vector<1x64xf32>
    %152 = arith.negf %151 : vector<1x64xf32>
    %153 = math.exp %152 : vector<1x64xf32>
    %cst_36 = arith.constant 1.000000e+00 : f32
    %154 = vector.broadcast %cst_36 : f32 to vector<1x64xf32>
    %155 = arith.addf %154, %153 : vector<1x64xf32>
    %156 = arith.divf %154, %155 : vector<1x64xf32>
    %157 = vector.extract_strided_slice %156 {offsets = [0, 0], sizes = [1, 32], strides = [1, 1]} : vector<1x64xf32> to vector<1x32xf32>
    %158 = vector.extract_strided_slice %156 {offsets = [0, 32], sizes = [1, 32], strides = [1, 1]} : vector<1x64xf32> to vector<1x32xf32>
    %159 = vector.extract_strided_slice %146 {offsets = [0, 64], sizes = [1, 32], strides = [1, 1]} : vector<1x96xf32> to vector<1x32xf32>
    %160 = vector.extract_strided_slice %148 {offsets = [0, 64], sizes = [1, 32], strides = [1, 1]} : vector<1x96xf32> to vector<1x32xf32>
    %161 = arith.mulf %157, %160 : vector<1x32xf32>
    %162 = arith.addf %159, %161 : vector<1x32xf32>
    %163 = math.tanh %162 : vector<1x32xf32>
    %cst_37 = arith.constant 1.000000e+00 : f32
    %164 = vector.broadcast %cst_37 : f32 to vector<1x32xf32>
    %165 = arith.subf %164, %158 : vector<1x32xf32>
    %166 = arith.mulf %165, %163 : vector<1x32xf32>
    %167 = arith.mulf %158, %145 : vector<1x32xf32>
    %168 = arith.addf %166, %167 : vector<1x32xf32>
    %169 = vector.extract_strided_slice %27 {offsets = [6, 0], sizes = [1, 96], strides = [1, 1]} : vector<8x96xf32> to vector<1x96xf32>
    %cst_38 = arith.constant dense<0.000000e+00> : vector<1x96xf32>
    %170 = tpu.matmul %168, %28, %cst_38 {dimension_numbers = #tpu.dot_dimension_numbers<[1], [0], [0], [1], [0, 0, 1, 1], [], []>} : vector<1x32xf32>, vector<32x96xf32>, vector<1x96xf32> -> vector<1x96xf32>
    %171 = arith.addf %170, %29 : vector<1x96xf32>
    %172 = vector.extract_strided_slice %169 {offsets = [0, 0], sizes = [1, 64], strides = [1, 1]} : vector<1x96xf32> to vector<1x64xf32>
    %173 = vector.extract_strided_slice %171 {offsets = [0, 0], sizes = [1, 64], strides = [1, 1]} : vector<1x96xf32> to vector<1x64xf32>
    %174 = arith.addf %172, %173 : vector<1x64xf32>
    %175 = arith.negf %174 : vector<1x64xf32>
    %176 = math.exp %175 : vector<1x64xf32>
    %cst_39 = arith.constant 1.000000e+00 : f32
    %177 = vector.broadcast %cst_39 : f32 to vector<1x64xf32>
    %178 = arith.addf %177, %176 : vector<1x64xf32>
    %179 = arith.divf %177, %178 : vector<1x64xf32>
    %180 = vector.extract_strided_slice %179 {offsets = [0, 0], sizes = [1, 32], strides = [1, 1]} : vector<1x64xf32> to vector<1x32xf32>
    %181 = vector.extract_strided_slice %179 {offsets = [0, 32], sizes = [1, 32], strides = [1, 1]} : vector<1x64xf32> to vector<1x32xf32>
    %182 = vector.extract_strided_slice %169 {offsets = [0, 64], sizes = [1, 32], strides = [1, 1]} : vector<1x96xf32> to vector<1x32xf32>
    %183 = vector.extract_strided_slice %171 {offsets = [0, 64], sizes = [1, 32], strides = [1, 1]} : vector<1x96xf32> to vector<1x32xf32>
    %184 = arith.mulf %180, %183 : vector<1x32xf32>
    %185 = arith.addf %182, %184 : vector<1x32xf32>
    %186 = math.tanh %185 : vector<1x32xf32>
    %cst_40 = arith.constant 1.000000e+00 : f32
    %187 = vector.broadcast %cst_40 : f32 to vector<1x32xf32>
    %188 = arith.subf %187, %181 : vector<1x32xf32>
    %189 = arith.mulf %188, %186 : vector<1x32xf32>
    %190 = arith.mulf %181, %168 : vector<1x32xf32>
    %191 = arith.addf %189, %190 : vector<1x32xf32>
    %192 = vector.extract_strided_slice %27 {offsets = [7, 0], sizes = [1, 96], strides = [1, 1]} : vector<8x96xf32> to vector<1x96xf32>
    %cst_41 = arith.constant dense<0.000000e+00> : vector<1x96xf32>
    %193 = tpu.matmul %191, %28, %cst_41 {dimension_numbers = #tpu.dot_dimension_numbers<[1], [0], [0], [1], [0, 0, 1, 1], [], []>} : vector<1x32xf32>, vector<32x96xf32>, vector<1x96xf32> -> vector<1x96xf32>
    %194 = arith.addf %193, %29 : vector<1x96xf32>
    %195 = vector.extract_strided_slice %192 {offsets = [0, 0], sizes = [1, 64], strides = [1, 1]} : vector<1x96xf32> to vector<1x64xf32>
    %196 = vector.extract_strided_slice %194 {offsets = [0, 0], sizes = [1, 64], strides = [1, 1]} : vector<1x96xf32> to vector<1x64xf32>
    %197 = arith.addf %195, %196 : vector<1x64xf32>
    %198 = arith.negf %197 : vector<1x64xf32>
    %199 = math.exp %198 : vector<1x64xf32>
    %cst_42 = arith.constant 1.000000e+00 : f32
    %200 = vector.broadcast %cst_42 : f32 to vector<1x64xf32>
    %201 = arith.addf %200, %199 : vector<1x64xf32>
    %202 = arith.divf %200, %201 : vector<1x64xf32>
    %203 = vector.extract_strided_slice %202 {offsets = [0, 0], sizes = [1, 32], strides = [1, 1]} : vector<1x64xf32> to vector<1x32xf32>
    %204 = vector.extract_strided_slice %202 {offsets = [0, 32], sizes = [1, 32], strides = [1, 1]} : vector<1x64xf32> to vector<1x32xf32>
    %205 = vector.extract_strided_slice %192 {offsets = [0, 64], sizes = [1, 32], strides = [1, 1]} : vector<1x96xf32> to vector<1x32xf32>
    %206 = vector.extract_strided_slice %194 {offsets = [0, 64], sizes = [1, 32], strides = [1, 1]} : vector<1x96xf32> to vector<1x32xf32>
    %207 = arith.mulf %203, %206 : vector<1x32xf32>
    %208 = arith.addf %205, %207 : vector<1x32xf32>
    %209 = math.tanh %208 : vector<1x32xf32>
    %cst_43 = arith.constant 1.000000e+00 : f32
    %210 = vector.broadcast %cst_43 : f32 to vector<1x32xf32>
    %211 = arith.subf %210, %204 : vector<1x32xf32>
    %212 = arith.mulf %211, %209 : vector<1x32xf32>
    %213 = arith.mulf %204, %191 : vector<1x32xf32>
    %214 = arith.addf %212, %213 : vector<1x32xf32>
    %c3 = arith.constant 3 : index
    %c0_44 = arith.constant 0 : index
    %215 = vector.load %arg6[%c3, %c0_44] : memref<4x128xf32, #tpu.memory_space<vmem>>, vector<1x128xf32>
    %c0_45 = arith.constant 0 : index
    %c0_46 = arith.constant 0 : index
    %216 = vector.load %arg5[%c0_45, %c0_46] : memref<32x128xf32, #tpu.memory_space<vmem>>, vector<32x128xf32>
    %cst_47 = arith.constant dense<0.000000e+00> : vector<1x128xf32>
    %217 = tpu.matmul %214, %216, %cst_47 {dimension_numbers = #tpu.dot_dimension_numbers<[1], [0], [0], [1], [0, 0, 1, 1], [], []>} : vector<1x32xf32>, vector<32x128xf32>, vector<1x128xf32> -> vector<1x128xf32>
    %218 = arith.addf %217, %215 : vector<1x128xf32>
    %c0_48 = arith.constant 0 : index
    %c0_49 = arith.constant 0 : index
    %219 = vector.load %arg8[%c0_48, %c0_49] : memref<1x128xf32, #tpu.memory_space<vmem>>, vector<1x128xf32>
    tpu.vector_store %arg8[%c0_48, %c0_49], %218 {strides = array<i32>} : memref<1x128xf32, #tpu.memory_space<vmem>>, vector<1x128xf32>,
    return
  }
}

</mosaic_0001>

<llo_original>
// kernel: tpu_custom_call.1
$region0: #{tpu_custom_call.1}
  #allocation0 [shape = 'u32[]', space=smem, size = 0x4, offset = 0x4, fixed_abs, tag = 'smem constant byte address 0x4 - core index']
  #allocation1 [shape = 'u32[144,128]{1,0:T(1,128)}', space=vmem, size = 0x12000, scoped, tag = 'internal scratch']
  %s0 = inlined_call_operand.vmem [shape: f32[8,1], index: 0, kind: input, shape index: {}]
  %s1 = inlined_call_operand.vmem [shape: f32[2,16], index: 1, kind: input, shape index: {}]
  %s2 = inlined_call_operand.hbm [shape: f32[16,32], index: 2, kind: input, shape index: {}]
  %s3 = inlined_call_operand.hbm [shape: f32[32,96], index: 3, kind: input, shape index: {}]
  %s4 = inlined_call_operand.hbm [shape: f32[32,96], index: 4, kind: input, shape index: {}]
  %s5 = inlined_call_operand.hbm [shape: f32[32,128], index: 5, kind: input, shape index: {}]
  %s6 = inlined_call_operand.vmem [shape: f32[4,128], index: 6, kind: input, shape index: {}]
  %s7 = inlined_call_operand.vmem [shape: f32[1,32], index: 7, kind: input, shape index: {}]
  %s8 = inlined_call_operand.hbm [shape: f32[1,128], index: 8, kind: output, shape index: {}]
  %s9 = sld [smem:[#allocation0]]
  $region58: #{tpu_custom_call.1} parent=0
    _
  %s11 = ssub.s32 1, %s9
  %s12 = scalar_select 0, %s11, %s9
  $region1: #{tpu_custom_call.1} parent=0
    #allocation2 [shape = 'u8[8192]{0}', space=vmem, size = 0x2000, scoped, tag = 'input window, operand 2, single buffered']
    #allocation3 [shape = 's32[1]{0}', space=sflag, size = 0x4, scoped, tag = 'scoped memory for tpu_custom_call.1']
    #allocation4 [shape = 's32[1]{0}', space=sflag, size = 0x4, scoped, tag = 'scoped memory for tpu_custom_call.1']
    #allocation5 [shape = 'u8[16384]{0}', space=vmem, size = 0x4000, scoped, tag = 'input window, operand 3, single buffered']
    #allocation6 [shape = 's32[1]{0}', space=sflag, size = 0x4, scoped, tag = 'scoped memory for tpu_custom_call.1']
    #allocation7 [shape = 'u8[16384]{0}', space=vmem, size = 0x4000, scoped, tag = 'input window, operand 4, single buffered']
    #allocation8 [shape = 'u8[16384]{0}', space=vmem, size = 0x4000, scoped, tag = 'input window, operand 5, single buffered']
    #allocation9 [shape = 's32[1]{0}', space=sflag, size = 0x4, scoped, tag = 'scoped memory for tpu_custom_call.1']
    #allocation10 [shape = 'u8[512]{0}', space=vmem, size = 0x400, scoped, tag = 'output window, operand 0, single buffered']
    %13 = vsyncpa [#allocation3], 0
    %14 = vsyncpa [#allocation6], 0
    %15 = vsyncpa [#allocation9], 0
    %16 = vsyncpa [#allocation4], 0
    // Predicated region
    $region2: #{tpu_custom_call.1} parent=1 // pred_check
      _
    $region3: #{tpu_custom_call.1} parent=1 // pred_check_branch
      %18 = sbr.rel (0) target = $region5
    $region4: #{tpu_custom_call.1} parent=1 // pred_region
      _
    $region5: #{tpu_custom_call.1} parent=1 // pred_fallthru
      _
    // Predicated region
    $region6: #{tpu_custom_call.1} parent=1 // pred_check
      _
    $region7: #{tpu_custom_call.1} parent=1 // pred_check_branch
      %20 = sbr.rel (0) target = $region9
    $region8: #{tpu_custom_call.1} parent=1 // pred_region
      _
    $region9: #{tpu_custom_call.1} parent=1 // pred_fallthru
      _
    // Predicated region
    $region10: #{tpu_custom_call.1} parent=1 // pred_check
      _
    $region11: #{tpu_custom_call.1} parent=1 // pred_check_branch
      %22 = sbr.rel (0) target = $region13
    $region12: #{tpu_custom_call.1} parent=1 // pred_region
      %s24 = ssub.s32 256, 256
      %25 = vsyncadd [#allocation3], %s24
      %s26 = sshll.u32 [#allocation2], 4
      %s27 = int_to_ptr.vmem [resolvable:$true] %s26
      %32 = dma.hbm_to_vmem [thread:$0]  %s2, 256, %s27, [#allocation3], 128, 128, 8
    $region13: #{tpu_custom_call.1} parent=1 // pred_fallthru
      _
    // Predicated region
    $region14: #{tpu_custom_call.1} parent=1 // pred_check
      _
    $region15: #{tpu_custom_call.1} parent=1 // pred_check_branch
      %34 = sbr.rel (0) target = $region17
    $region16: #{tpu_custom_call.1} parent=1 // pred_region
      %s36 = ssub.s32 512, 512
      %37 = vsyncadd [#allocation6], %s36
      %s38 = sshll.u32 [#allocation5], 4
      %s39 = int_to_ptr.vmem [resolvable:$true] %s38
      %44 = dma.hbm_to_vmem [thread:$0]  %s3, 512, %s39, [#allocation6], 128, 128, 8
    $region17: #{tpu_custom_call.1} parent=1 // pred_fallthru
      _
    // Predicated region
    $region18: #{tpu_custom_call.1} parent=1 // pred_check
      _
    $region19: #{tpu_custom_call.1} parent=1 // pred_check_branch
      %46 = sbr.rel (0) target = $region21
    $region20: #{tpu_custom_call.1} parent=1 // pred_region
      %s48 = ssub.s32 512, 512
      %49 = vsyncadd [#allocation6], %s48
      %s50 = sshll.u32 [#allocation7], 4
      %s51 = int_to_ptr.vmem [resolvable:$true] %s50
      %56 = dma.hbm_to_vmem [thread:$0]  %s4, 512, %s51, [#allocation6], 128, 128, 8
    $region21: #{tpu_custom_call.1} parent=1 // pred_fallthru
      _
    // Predicated region
    $region22: #{tpu_custom_call.1} parent=1 // pred_check
      _
    $region23: #{tpu_custom_call.1} parent=1 // pred_check_branch
      %58 = sbr.rel (0) target = $region25
    $region24: #{tpu_custom_call.1} parent=1 // pred_region
      %s60 = ssub.s32 512, 512
      %61 = vsyncadd [#allocation9], %s60
      %s62 = sshll.u32 [#allocation8], 4
      %s63 = int_to_ptr.vmem [resolvable:$true] %s62
      %68 = dma.hbm_to_vmem [thread:$0]  %s5, 512, %s63, [#allocation9], 128, 128, 8
    $region25: #{tpu_custom_call.1} parent=1 // pred_fallthru
      _
    // Predicated region
    $region26: #{tpu_custom_call.1} parent=1 // pred_check
      _
    $region27: #{tpu_custom_call.1} parent=1 // pred_check_branch
      %70 = sbr.rel (0) target = $region29
    $region28: #{tpu_custom_call.1} parent=1 // pred_region
      _
    $region29: #{tpu_custom_call.1} parent=1 // pred_fallthru
      _
    // Predicated region
    $region30: #{tpu_custom_call.1} parent=1 // pred_check
      _
    $region31: #{tpu_custom_call.1} parent=1 // pred_check_branch
      %72 = sbr.rel (0) target = $region33
    $region32: #{tpu_custom_call.1} parent=1 // pred_region
      _
    $region33: #{tpu_custom_call.1} parent=1 // pred_fallthru
      _
    // Predicated region
    $region34: #{tpu_custom_call.1} parent=1 // pred_check
      _
    $region35: #{tpu_custom_call.1} parent=1 // pred_check_branch
      %74 = sbr.rel (0) target = $region37
    $region36: #{tpu_custom_call.1} parent=1 // pred_region
      %75 = dma.done [#allocation3], 256
    $region37: #{tpu_custom_call.1} parent=1 // pred_fallthru
      _
    // Predicated region
    $region38: #{tpu_custom_call.1} parent=1 // pred_check
      _
    $region39: #{tpu_custom_call.1} parent=1 // pred_check_branch
      %77 = sbr.rel (0) target = $region41
    $region40: #{tpu_custom_call.1} parent=1 // pred_region
      %78 = dma.done [#allocation6], 512
    $region41: #{tpu_custom_call.1} parent=1 // pred_fallthru
      _
    // Predicated region
    $region42: #{tpu_custom_call.1} parent=1 // pred_check
      _
    $region43: #{tpu_custom_call.1} parent=1 // pred_check_branch
      %80 = sbr.rel (0) target = $region45
    $region44: #{tpu_custom_call.1} parent=1 // pred_region
      %81 = dma.done [#allocation6], 512
    $region45: #{tpu_custom_call.1} parent=1 // pred_fallthru
      _
    // Predicated region
    $region46: #{tpu_custom_call.1} parent=1 // pred_check
      _
    $region47: #{tpu_custom_call.1} parent=1 // pred_check_branch
      %83 = sbr.rel (0) target = $region49
    $region48: #{tpu_custom_call.1} parent=1 // pred_region
      %84 = dma.done [#allocation9], 512
    $region49: #{tpu_custom_call.1} parent=1 // pred_fallthru
      _
    %v85 = vld [vmem:[%s0] sm:$0xff]
    %v86 = vld [vmem:[%s1] sm:$0x1]
    %v87 = vld [vmem:[%s1 + $0x1] sm:$0x1]
    %89 = vset.pattern.permute.xlu0 0
    %90 = vperm.xlu0 %89, %v85
    %v91 = vpop.permute.xlu0 %90
    %v93 = vlaneseq
    %v94 = vshrl.u32 %v93, 7
    %v95 = vsub.s32 0, %v94
    %v96 = vrot.slane %v86, %v95
    %v97 = vmul.f32 %v91, %v96
    %v98 = vlaneseq
    %v99 = vshrl.u32 %v98, 7
    %v100 = vsub.s32 0, %v99
    %v101 = vrot.slane %v87, %v100
    %v102 = vadd.f32 %v97, %v101
    %v103 = vxor.u32 %v102, 2147483648
    %v104 = vmul.f32 %v103, 1.442695
    %v105 = vpow.pop %v104
    %v106 = vadd.f32 %v105, 1.0
    %v107 = vrcp.pop %v106
    %v108 = vmul.f32 1.0, %v107
    %v109 = vld [vmem:[%s6] sm:$0x1]
    %v110 = vld [vmem:[#allocation2] sm:$0xff]
    %v111 = vld [vmem:[#allocation2 + $0x8] sm:$0xff]
    %v112 = vlaneseq
    %v113 = vshrl.u32 %v112, 7
    %v114 = vsub.s32 0, %v113
    %v115 = vrot.slane %v109, %v114
    %vm116 = vcmask 130048
    %v118 = vsel %vm116, %v108, 0
    %120 = vmatprep.subr.mxu0 0.0
    %121 = vmatpush1.msra.mxu0 0.0
    %122 = vmatprep.subr.mxu0 0.0
    %123 = vmatpush1.msra.mxu0 0.0
    %124 = vmatprep.subr.mxu0 0.0
    %125 = vmatpush1.msra.mxu0 0.0
    %126 = vmatprep.subr.mxu0 0.0
    %127 = vmatpush1.msra.mxu0 0.0
    %128 = vmatprep.subr.mxu0 0.0
    %129 = vmatpush1.msra.mxu0 0.0
    %130 = vmatprep.subr.mxu0 0.0
    %131 = vmatpush1.msra.mxu0 0.0
    %132 = vmatprep.subr.mxu0 0.0
    %133 = vmatpush1.msra.mxu0 0.0
    %134 = vmatprep.subr.mxu0 0.0
    %135 = vmatpush1.msra.mxu0 0.0
    %136 = vmatprep.subr.mxu0 0.0
    %137 = vmatpush1.msra.mxu0 0.0
    %138 = vmatprep.subr.mxu0 0.0
    %139 = vmatpush1.msra.mxu0 0.0
    %140 = vmatprep.subr.mxu0 0.0
    %141 = vmatpush1.msra.mxu0 0.0
    %142 = vmatprep.subr.mxu0 0.0
    %143 = vmatpush1.msra.mxu0 0.0
    %144 = vmatprep.subr.mxu0 0.0
    %145 = vmatpush1.msra.mxu0 0.0
    %146 = vmatprep.subr.mxu0 0.0
    %147 = vmatpush1.msra.mxu0 0.0
    %148 = vmatprep.subr.mxu0 0.0
    %149 = vmatpush1.msra.mxu0 %v111
    %150 = vmatprep.subr.mxu0 0.0
    %151 = vmatpush1.msra.mxu0 %v110
    %152 = vmatprep.subr.mxu0 0.0
    %153 = vmatpush2.msra.mxu0 0.0
    %154 = vmatprep.subr.mxu0 0.0
    %155 = vmatpush2.msra.mxu0 0.0
    %156 = vmatprep.subr.mxu0 0.0
    %157 = vmatpush2.msra.mxu0 0.0
    %158 = vmatprep.subr.mxu0 0.0
    %159 = vmatpush2.msra.mxu0 0.0
    %160 = vmatprep.subr.mxu0 0.0
    %161 = vmatpush2.msra.mxu0 0.0
    %162 = vmatprep.subr.mxu0 0.0
    %163 = vmatpush2.msra.mxu0 0.0
    %164 = vmatprep.subr.mxu0 0.0
    %165 = vmatpush2.msra.mxu0 0.0
    %166 = vmatprep.subr.mxu0 0.0
    %167 = vmatpush2.msra.mxu0 0.0
    %168 = vmatprep.subr.mxu0 0.0
    %169 = vmatpush2.msra.mxu0 0.0
    %170 = vmatprep.subr.mxu0 0.0
    %171 = vmatpush2.msra.mxu0 0.0
    %172 = vmatprep.subr.mxu0 0.0
    %173 = vmatpush2.msra.mxu0 0.0
    %174 = vmatprep.subr.mxu0 0.0
    %175 = vmatpush2.msra.mxu0 0.0
    %176 = vmatprep.subr.mxu0 0.0
    %177 = vmatpush2.msra.mxu0 0.0
    %178 = vmatprep.subr.mxu0 0.0
    %179 = vmatpush2.msra.mxu0 0.0
    %180 = vmatprep.subr.mxu0 0.0
    %181 = vmatpush2.msra.mxu0 0.0
    %182 = vmatprep.subr.mxu0 0.0
    %183 = vmatpush2.msra.mxu0 0.0
    %184 = vmatprep.mubr.f32.mxu0 0.0
    %185 = vmatmul.mubr.f32.gmra.mxu0 %v118
    %v186 = vpop.f32.mrf.mxu0
    %v187 = vadd.f32 %v115, %v186
    %v188 = vpop.f32.mrf.mxu0
    %189 = vdwg.mxu0
    %v190 = vxor.u32 %v187, 2147483648
    %v191 = vmul.f32 %v190, 1.442695
    %v192 = vpow.pop %v191
    %v193 = vadd.f32 %v192, 1.0
    %v194 = vrcp.pop %v193
    %v195 = vmul.f32 1.0, %v194
    %v196 = vld [vmem:[%s6 + $0x1] sm:$0x1]
    %v197 = vld [vmem:[#allocation5] sm:$0xff]
    %v198 = vld [vmem:[#allocation5 + $0x8] sm:$0xff]
    %v199 = vld [vmem:[#allocation5 + $0x10] sm:$0xff]
    %v200 = vld [vmem:[#allocation5 + $0x18] sm:$0xff]
    %v201 = vlaneseq
    %v202 = vshrl.u32 %v201, 7
    %v203 = vsub.s32 0, %v202
    %v204 = vrot.slane %v196, %v203
    %vm205 = vcmask 261120
    %v207 = vsel %vm205, %v195, 0
    %209 = vmatprep.subr.mxu0 0.0
    %210 = vmatpush1.msra.mxu0 0.0
    %211 = vmatprep.subr.mxu0 0.0
    %212 = vmatpush1.msra.mxu0 0.0
    %213 = vmatprep.subr.mxu0 0.0
    %214 = vmatpush1.msra.mxu0 0.0
    %215 = vmatprep.subr.mxu0 0.0
    %216 = vmatpush1.msra.mxu0 0.0
    %217 = vmatprep.subr.mxu0 0.0
    %218 = vmatpush1.msra.mxu0 0.0
    %219 = vmatprep.subr.mxu0 0.0
    %220 = vmatpush1.msra.mxu0 0.0
    %221 = vmatprep.subr.mxu0 0.0
    %222 = vmatpush1.msra.mxu0 0.0
    %223 = vmatprep.subr.mxu0 0.0
    %224 = vmatpush1.msra.mxu0 0.0
    %225 = vmatprep.subr.mxu0 0.0
    %226 = vmatpush1.msra.mxu0 0.0
    %227 = vmatprep.subr.mxu0 0.0
    %228 = vmatpush1.msra.mxu0 0.0
    %229 = vmatprep.subr.mxu0 0.0
    %230 = vmatpush1.msra.mxu0 0.0
    %231 = vmatprep.subr.mxu0 0.0
    %232 = vmatpush1.msra.mxu0 0.0
    %233 = vmatprep.subr.mxu0 0.0
    %234 = vmatpush1.msra.mxu0 %v200
    %235 = vmatprep.subr.mxu0 0.0
    %236 = vmatpush1.msra.mxu0 %v199
    %237 = vmatprep.subr.mxu0 0.0
    %238 = vmatpush1.msra.mxu0 %v198
    %239 = vmatprep.subr.mxu0 0.0
    %240 = vmatpush1.msra.mxu0 %v197
    %241 = vmatprep.subr.mxu0 0.0
    %242 = vmatpush2.msra.mxu0 0.0
    %243 = vmatprep.subr.mxu0 0.0
    %244 = vmatpush2.msra.mxu0 0.0
    %245 = vmatprep.subr.mxu0 0.0
    %246 = vmatpush2.msra.mxu0 0.0
    %247 = vmatprep.subr.mxu0 0.0
    %248 = vmatpush2.msra.mxu0 0.0
    %249 = vmatprep.subr.mxu0 0.0
    %250 = vmatpush2.msra.mxu0 0.0
    %251 = vmatprep.subr.mxu0 0.0
    %252 = vmatpush2.msra.mxu0 0.0
    %253 = vmatprep.subr.mxu0 0.0
    %254 = vmatpush2.msra.mxu0 0.0
    %255 = vmatprep.subr.mxu0 0.0
    %256 = vmatpush2.msra.mxu0 0.0
    %257 = vmatprep.subr.mxu0 0.0
    %258 = vmatpush2.msra.mxu0 0.0
    %259 = vmatprep.subr.mxu0 0.0
    %260 = vmatpush2.msra.mxu0 0.0
    %261 = vmatprep.subr.mxu0 0.0
    %262 = vmatpush2.msra.mxu0 0.0
    %263 = vmatprep.subr.mxu0 0.0
    %264 = vmatpush2.msra.mxu0 0.0
    %265 = vmatprep.subr.mxu0 0.0
    %266 = vmatpush2.msra.mxu0 0.0
    %267 = vmatprep.subr.mxu0 0.0
    %268 = vmatpush2.msra.mxu0 0.0
    %269 = vmatprep.subr.mxu0 0.0
    %270 = vmatpush2.msra.mxu0 0.0
    %271 = vmatprep.subr.mxu0 0.0
    %272 = vmatpush2.msra.mxu0 0.0
    %273 = vmatprep.mubr.f32.mxu0 0.0
    %274 = vmatmul.mubr.f32.gmra.mxu0 %v207
    %v275 = vpop.f32.mrf.mxu0
    %v276 = vadd.f32 %v204, %v275
    %v277 = vpop.f32.mrf.mxu0
    %278 = vdwg.mxu0
    %v279 = vld [vmem:[#allocation7] sm:$0xff]
    %v280 = vld [vmem:[#allocation7 + $0x8] sm:$0xff]
    %v281 = vld [vmem:[#allocation7 + $0x10] sm:$0xff]
    %v282 = vld [vmem:[#allocation7 + $0x18] sm:$0xff]
    %v283 = vld [vmem:[%s6 + $0x2] sm:$0x1]
    %v284 = vld [vmem:[%s7] sm:$0x1]
    %v286 = vsel %vm205, %v284, 0
    %288 = vmatprep.subr.mxu0 0.0
    %289 = vmatpush1.msra.mxu0 0.0
    %290 = vmatprep.subr.mxu0 0.0
    %291 = vmatpush1.msra.mxu0 0.0
    %292 = vmatprep.subr.mxu0 0.0
    %293 = vmatpush1.msra.mxu0 0.0
    %294 = vmatprep.subr.mxu0 0.0
    %295 = vmatpush1.msra.mxu0 0.0
    %296 = vmatprep.subr.mxu0 0.0
    %297 = vmatpush1.msra.mxu0 0.0
    %298 = vmatprep.subr.mxu0 0.0
    %299 = vmatpush1.msra.mxu0 0.0
    %300 = vmatprep.subr.mxu0 0.0
    %301 = vmatpush1.msra.mxu0 0.0
    %302 = vmatprep.subr.mxu0 0.0
    %303 = vmatpush1.msra.mxu0 0.0
    %304 = vmatprep.subr.mxu0 0.0
    %305 = vmatpush1.msra.mxu0 0.0
    %306 = vmatprep.subr.mxu0 0.0
    %307 = vmatpush1.msra.mxu0 0.0
    %308 = vmatprep.subr.mxu0 0.0
    %309 = vmatpush1.msra.mxu0 0.0
    %310 = vmatprep.subr.mxu0 0.0
    %311 = vmatpush1.msra.mxu0 0.0
    %312 = vmatprep.subr.mxu0 0.0
    %313 = vmatpush1.msra.mxu0 %v282
    %314 = vmatprep.subr.mxu0 0.0
    %315 = vmatpush1.msra.mxu0 %v281
    %316 = vmatprep.subr.mxu0 0.0
    %317 = vmatpush1.msra.mxu0 %v280
    %318 = vmatprep.subr.mxu0 0.0
    %319 = vmatpush1.msra.mxu0 %v279
    %320 = vmatprep.subr.mxu0 0.0
    %321 = vmatpush2.msra.mxu0 0.0
    %322 = vmatprep.subr.mxu0 0.0
    %323 = vmatpush2.msra.mxu0 0.0
    %324 = vmatprep.subr.mxu0 0.0
    %325 = vmatpush2.msra.mxu0 0.0
    %326 = vmatprep.subr.mxu0 0.0
    %327 = vmatpush2.msra.mxu0 0.0
    %328 = vmatprep.subr.mxu0 0.0
    %329 = vmatpush2.msra.mxu0 0.0
    %330 = vmatprep.subr.mxu0 0.0
    %331 = vmatpush2.msra.mxu0 0.0
    %332 = vmatprep.subr.mxu0 0.0
    %333 = vmatpush2.msra.mxu0 0.0
    %334 = vmatprep.subr.mxu0 0.0
    %335 = vmatpush2.msra.mxu0 0.0
    %336 = vmatprep.subr.mxu0 0.0
    %337 = vmatpush2.msra.mxu0 0.0
    %338 = vmatprep.subr.mxu0 0.0
    %339 = vmatpush2.msra.mxu0 0.0
    %340 = vmatprep.subr.mxu0 0.0
    %341 = vmatpush2.msra.mxu0 0.0
    %342 = vmatprep.subr.mxu0 0.0
    %343 = vmatpush2.msra.mxu0 0.0
    %344 = vmatprep.subr.mxu0 0.0
    %345 = vmatpush2.msra.mxu0 0.0
    %346 = vmatprep.subr.mxu0 0.0
    %347 = vmatpush2.msra.mxu0 0.0
    %348 = vmatprep.subr.mxu0 0.0
    %349 = vmatpush2.msra.mxu0 0.0
    %350 = vmatprep.subr.mxu0 0.0
    %351 = vmatpush2.msra.mxu0 0.0
    %352 = vmatprep.mubr.f32.mxu0 0.0
    %353 = vmatmul.mubr.f32.gmra.mxu0 %v286
    %v354 = vpop.f32.mrf.mxu0
    %v355 = vadd.f32 %v283, %v354
    %v356 = vpop.f32.mrf.mxu0
    %357 = vdwg.mxu0
    %v358 = vadd.f32 %v276, %v355
    %v359 = vxor.u32 %v358, 2147483648
    %v360 = vmul.f32 %v359, 1.442695
    %v361 = vpow.pop %v360
    %v362 = vadd.f32 %v361, 1.0
    %v363 = vrcp.pop %v362
    %v364 = vmul.f32 1.0, %v363
    %366 = vrot.lane.b32.xlu0 %v355, 64
    %v367 = vpop.permute.xlu0 %366
    %v369 = vmul.f32 %v364, %v367
    %371 = vrot.lane.b32.xlu0 %v369, 64
    %v372 = vpop.permute.xlu0 %371
    %v374 = vadd.f32 %v276, %v372
    %v375 = vtanh.pop %v374
    %v376 = vsub.f32 1.0, %v364
    %378 = vrot.lane.b32.xlu0 %v375, 96
    %v379 = vpop.permute.xlu0 %378
    %v381 = vmul.f32 %v376, %v379
    %v382 = vlaneseq
    %v383 = vshrl.u32 %v382, 7
    %v384 = vsub.s32 0, %v383
    %v385 = vrot.slane %v284, %v384
    %386 = vrot.lane.b32.xlu0 %v385, 32
    %v387 = vpop.permute.xlu0 %386
    %v389 = vmul.f32 %v364, %v387
    %v390 = vadd.f32 %v381, %v389
    %392 = vrot.lane.b32.xlu0 %v390, 96
    %v393 = vpop.permute.xlu0 %392
    %v394 = vsel %vm205, %v393, 0
    %396 = vmatprep.subr.mxu0 0.0
    %397 = vmatpush1.msra.mxu0 0.0
    %398 = vmatprep.subr.mxu0 0.0
    %399 = vmatpush1.msra.mxu0 0.0
    %400 = vmatprep.subr.mxu0 0.0
    %401 = vmatpush1.msra.mxu0 0.0
    %402 = vmatprep.subr.mxu0 0.0
    %403 = vmatpush1.msra.mxu0 0.0
    %404 = vmatprep.subr.mxu0 0.0
    %405 = vmatpush1.msra.mxu0 0.0
    %406 = vmatprep.subr.mxu0 0.0
    %407 = vmatpush1.msra.mxu0 0.0
    %408 = vmatprep.subr.mxu0 0.0
    %409 = vmatpush1.msra.mxu0 0.0
    %410 = vmatprep.subr.mxu0 0.0
    %411 = vmatpush1.msra.mxu0 0.0
    %412 = vmatprep.subr.mxu0 0.0
    %413 = vmatpush1.msra.mxu0 0.0
    %414 = vmatprep.subr.mxu0 0.0
    %415 = vmatpush1.msra.mxu0 0.0
    %416 = vmatprep.subr.mxu0 0.0
    %417 = vmatpush1.msra.mxu0 0.0
    %418 = vmatprep.subr.mxu0 0.0
    %419 = vmatpush1.msra.mxu0 0.0
    %420 = vmatprep.subr.mxu0 0.0
    %421 = vmatpush1.msra.mxu0 %v282
    %422 = vmatprep.subr.mxu0 0.0
    %423 = vmatpush1.msra.mxu0 %v281
    %424 = vmatprep.subr.mxu0 0.0
    %425 = vmatpush1.msra.mxu0 %v280
    %426 = vmatprep.subr.mxu0 0.0
    %427 = vmatpush1.msra.mxu0 %v279
    %428 = vmatprep.subr.mxu0 0.0
    %429 = vmatpush2.msra.mxu0 0.0
    %430 = vmatprep.subr.mxu0 0.0
    %431 = vmatpush2.msra.mxu0 0.0
    %432 = vmatprep.subr.mxu0 0.0
    %433 = vmatpush2.msra.mxu0 0.0
    %434 = vmatprep.subr.mxu0 0.0
    %435 = vmatpush2.msra.mxu0 0.0
    %436 = vmatprep.subr.mxu0 0.0
    %437 = vmatpush2.msra.mxu0 0.0
    %438 = vmatprep.subr.mxu0 0.0
    %439 = vmatpush2.msra.mxu0 0.0
    %440 = vmatprep.subr.mxu0 0.0
    %441 = vmatpush2.msra.mxu0 0.0
    %442 = vmatprep.subr.mxu0 0.0
    %443 = vmatpush2.msra.mxu0 0.0
    %444 = vmatprep.subr.mxu0 0.0
    %445 = vmatpush2.msra.mxu0 0.0
    %446 = vmatprep.subr.mxu0 0.0
    %447 = vmatpush2.msra.mxu0 0.0
    %448 = vmatprep.subr.mxu0 0.0
    %449 = vmatpush2.msra.mxu0 0.0
    %450 = vmatprep.subr.mxu0 0.0
    %451 = vmatpush2.msra.mxu0 0.0
    %452 = vmatprep.subr.mxu0 0.0
    %453 = vmatpush2.msra.mxu0 0.0
    %454 = vmatprep.subr.mxu0 0.0
    %455 = vmatpush2.msra.mxu0 0.0
    %456 = vmatprep.subr.mxu0 0.0
    %457 = vmatpush2.msra.mxu0 0.0
    %458 = vmatprep.subr.mxu0 0.0
    %459 = vmatpush2.msra.mxu0 0.0
    %460 = vmatprep.mubr.f32.mxu0 0.0
    %461 = vmatmul.mubr.f32.gmra.mxu0 %v394
    %v462 = vpop.f32.mrf.mxu0
    %v463 = vadd.f32 %v283, %v462
    %v464 = vpop.f32.mrf.mxu0
    %465 = vdwg.mxu0
    %v467 = vrot.slane %v463, 7
    %v469 = vadd.f32 %v276, %v467
    %v470 = vxor.u32 %v469, 2147483648
    %v471 = vmul.f32 %v470, 1.442695
    %v472 = vpow.pop %v471
    %v473 = vadd.f32 %v472, 1.0
    %v474 = vrcp.pop %v473
    %v475 = vmul.f32 1.0, %v474
    %476 = vrot.lane.b32.xlu0 %v467, 64
    %v477 = vpop.permute.xlu0 %476
    %v479 = vmul.f32 %v475, %v477
    %481 = vrot.lane.b32.xlu0 %v479, 64
    %v482 = vpop.permute.xlu0 %481
    %v484 = vadd.f32 %v276, %v482
    %v485 = vtanh.pop %v484
    %v486 = vsub.f32 1.0, %v475
    %488 = vrot.lane.b32.xlu0 %v485, 96
    %v489 = vpop.permute.xlu0 %488
    %v491 = vmul.f32 %v486, %v489
    %v492 = vrot.slane %v390, 7
    %v494 = vmul.f32 %v475, %v492
    %v495 = vadd.f32 %v491, %v494
    %v497 = vrot.slane %v495, 1
    %498 = vrot.lane.b32.xlu0 %v497, 96
    %v499 = vpop.permute.xlu0 %498
    %v500 = vsel %vm205, %v499, 0
    %502 = vmatprep.subr.mxu0 0.0
    %503 = vmatpush1.msra.mxu0 0.0
    %504 = vmatprep.subr.mxu0 0.0
    %505 = vmatpush1.msra.mxu0 0.0
    %506 = vmatprep.subr.mxu0 0.0
    %507 = vmatpush1.msra.mxu0 0.0
    %508 = vmatprep.subr.mxu0 0.0
    %509 = vmatpush1.msra.mxu0 0.0
    %510 = vmatprep.subr.mxu0 0.0
    %511 = vmatpush1.msra.mxu0 0.0
    %512 = vmatprep.subr.mxu0 0.0
    %513 = vmatpush1.msra.mxu0 0.0
    %514 = vmatprep.subr.mxu0 0.0
    %515 = vmatpush1.msra.mxu0 0.0
    %516 = vmatprep.subr.mxu0 0.0
    %517 = vmatpush1.msra.mxu0 0.0
    %518 = vmatprep.subr.mxu0 0.0
    %519 = vmatpush1.msra.mxu0 0.0
    %520 = vmatprep.subr.mxu0 0.0
    %521 = vmatpush1.msra.mxu0 0.0
    %522 = vmatprep.subr.mxu0 0.0
    %523 = vmatpush1.msra.mxu0 0.0
    %524 = vmatprep.subr.mxu0 0.0
    %525 = vmatpush1.msra.mxu0 0.0
    %526 = vmatprep.subr.mxu0 0.0
    %527 = vmatpush1.msra.mxu0 %v282
    %528 = vmatprep.subr.mxu0 0.0
    %529 = vmatpush1.msra.mxu0 %v281
    %530 = vmatprep.subr.mxu0 0.0
    %531 = vmatpush1.msra.mxu0 %v280
    %532 = vmatprep.subr.mxu0 0.0
    %533 = vmatpush1.msra.mxu0 %v279
    %534 = vmatprep.subr.mxu0 0.0
    %535 = vmatpush2.msra.mxu0 0.0
    %536 = vmatprep.subr.mxu0 0.0
    %537 = vmatpush2.msra.mxu0 0.0
    %538 = vmatprep.subr.mxu0 0.0
    %539 = vmatpush2.msra.mxu0 0.0
    %540 = vmatprep.subr.mxu0 0.0
    %541 = vmatpush2.msra.mxu0 0.0
    %542 = vmatprep.subr.mxu0 0.0
    %543 = vmatpush2.msra.mxu0 0.0
    %544 = vmatprep.subr.mxu0 0.0
    %545 = vmatpush2.msra.mxu0 0.0
    %546 = vmatprep.subr.mxu0 0.0
    %547 = vmatpush2.msra.mxu0 0.0
    %548 = vmatprep.subr.mxu0 0.0
    %549 = vmatpush2.msra.mxu0 0.0
    %550 = vmatprep.subr.mxu0 0.0
    %551 = vmatpush2.msra.mxu0 0.0
    %552 = vmatprep.subr.mxu0 0.0
    %553 = vmatpush2.msra.mxu0 0.0
    %554 = vmatprep.subr.mxu0 0.0
    %555 = vmatpush2.msra.mxu0 0.0
    %556 = vmatprep.subr.mxu0 0.0
    %557 = vmatpush2.msra.mxu0 0.0
    %558 = vmatprep.subr.mxu0 0.0
    %559 = vmatpush2.msra.mxu0 0.0
    %560 = vmatprep.subr.mxu0 0.0
    %561 = vmatpush2.msra.mxu0 0.0
    %562 = vmatprep.subr.mxu0 0.0
    %563 = vmatpush2.msra.mxu0 0.0
    %564 = vmatprep.subr.mxu0 0.0
    %565 = vmatpush2.msra.mxu0 0.0
    %566 = vmatprep.mubr.f32.mxu0 0.0
    %567 = vmatmul.mubr.f32.gmra.mxu0 %v500
    %v568 = vpop.f32.mrf.mxu0
    %v569 = vadd.f32 %v283, %v568
    %v570 = vpop.f32.mrf.mxu0
    %571 = vdwg.mxu0
    %v573 = vrot.slane %v569, 6
    %v575 = vadd.f32 %v276, %v573
    %v576 = vxor.u32 %v575, 2147483648
    %v577 = vmul.f32 %v576, 1.442695
    %v578 = vpow.pop %v577
    %v579 = vadd.f32 %v578, 1.0
    %v580 = vrcp.pop %v579
    %v581 = vmul.f32 1.0, %v580
    %582 = vrot.lane.b32.xlu0 %v573, 64
    %v583 = vpop.permute.xlu0 %582
    %v585 = vmul.f32 %v581, %v583
    %587 = vrot.lane.b32.xlu0 %v585, 64
    %v588 = vpop.permute.xlu0 %587
    %v590 = vadd.f32 %v276, %v588
    %v591 = vtanh.pop %v590
    %v592 = vsub.f32 1.0, %v581
    %594 = vrot.lane.b32.xlu0 %v591, 96
    %v595 = vpop.permute.xlu0 %594
    %v597 = vmul.f32 %v592, %v595
    %v598 = vrot.slane %v495, 7
    %v600 = vmul.f32 %v581, %v598
    %v601 = vadd.f32 %v597, %v600
    %v603 = vrot.slane %v601, 2
    %604 = vrot.lane.b32.xlu0 %v603, 96
    %v605 = vpop.permute.xlu0 %604
    %v606 = vsel %vm205, %v605, 0
    %608 = vmatprep.subr.mxu0 0.0
    %609 = vmatpush1.msra.mxu0 0.0
    %610 = vmatprep.subr.mxu0 0.0
    %611 = vmatpush1.msra.mxu0 0.0
    %612 = vmatprep.subr.mxu0 0.0
    %613 = vmatpush1.msra.mxu0 0.0
    %614 = vmatprep.subr.mxu0 0.0
    %615 = vmatpush1.msra.mxu0 0.0
    %616 = vmatprep.subr.mxu0 0.0
    %617 = vmatpush1.msra.mxu0 0.0
    %618 = vmatprep.subr.mxu0 0.0
    %619 = vmatpush1.msra.mxu0 0.0
    %620 = vmatprep.subr.mxu0 0.0
    %621 = vmatpush1.msra.mxu0 0.0
    %622 = vmatprep.subr.mxu0 0.0
    %623 = vmatpush1.msra.mxu0 0.0
    %624 = vmatprep.subr.mxu0 0.0
    %625 = vmatpush1.msra.mxu0 0.0
    %626 = vmatprep.subr.mxu0 0.0
    %627 = vmatpush1.msra.mxu0 0.0
    %628 = vmatprep.subr.mxu0 0.0
    %629 = vmatpush1.msra.mxu0 0.0
    %630 = vmatprep.subr.mxu0 0.0
    %631 = vmatpush1.msra.mxu0 0.0
    %632 = vmatprep.subr.mxu0 0.0
    %633 = vmatpush1.msra.mxu0 %v282
    %634 = vmatprep.subr.mxu0 0.0
    %635 = vmatpush1.msra.mxu0 %v281
    %636 = vmatprep.subr.mxu0 0.0
    %637 = vmatpush1.msra.mxu0 %v280
    %638 = vmatprep.subr.mxu0 0.0
    %639 = vmatpush1.msra.mxu0 %v279
    %640 = vmatprep.subr.mxu0 0.0
    %641 = vmatpush2.msra.mxu0 0.0
    %642 = vmatprep.subr.mxu0 0.0
    %643 = vmatpush2.msra.mxu0 0.0
    %644 = vmatprep.subr.mxu0 0.0
    %645 = vmatpush2.msra.mxu0 0.0
    %646 = vmatprep.subr.mxu0 0.0
    %647 = vmatpush2.msra.mxu0 0.0
    %648 = vmatprep.subr.mxu0 0.0
    %649 = vmatpush2.msra.mxu0 0.0
    %650 = vmatprep.subr.mxu0 0.0
    %651 = vmatpush2.msra.mxu0 0.0
    %652 = vmatprep.subr.mxu0 0.0
    %653 = vmatpush2.msra.mxu0 0.0
    %654 = vmatprep.subr.mxu0 0.0
    %655 = vmatpush2.msra.mxu0 0.0
    %656 = vmatprep.subr.mxu0 0.0
    %657 = vmatpush2.msra.mxu0 0.0
    %658 = vmatprep.subr.mxu0 0.0
    %659 = vmatpush2.msra.mxu0 0.0
    %660 = vmatprep.subr.mxu0 0.0
    %661 = vmatpush2.msra.mxu0 0.0
    %662 = vmatprep.subr.mxu0 0.0
    %663 = vmatpush2.msra.mxu0 0.0
    %664 = vmatprep.subr.mxu0 0.0
    %665 = vmatpush2.msra.mxu0 0.0
    %666 = vmatprep.subr.mxu0 0.0
    %667 = vmatpush2.msra.mxu0 0.0
    %668 = vmatprep.subr.mxu0 0.0
    %669 = vmatpush2.msra.mxu0 0.0
    %670 = vmatprep.subr.mxu0 0.0
    %671 = vmatpush2.msra.mxu0 0.0
    %672 = vmatprep.mubr.f32.mxu0 0.0
    %673 = vmatmul.mubr.f32.gmra.mxu0 %v606
    %v674 = vpop.f32.mrf.mxu0
    %v675 = vadd.f32 %v283, %v674
    %v676 = vpop.f32.mrf.mxu0
    %677 = vdwg.mxu0
    %v679 = vrot.slane %v675, 5
    %v681 = vadd.f32 %v276, %v679
    %v682 = vxor.u32 %v681, 2147483648
    %v683 = vmul.f32 %v682, 1.442695
    %v684 = vpow.pop %v683
    %v685 = vadd.f32 %v684, 1.0
    %v686 = vrcp.pop %v685
    %v687 = vmul.f32 1.0, %v686
    %688 = vrot.lane.b32.xlu0 %v679, 64
    %v689 = vpop.permute.xlu0 %688
    %v691 = vmul.f32 %v687, %v689
    %693 = vrot.lane.b32.xlu0 %v691, 64
    %v694 = vpop.permute.xlu0 %693
    %v696 = vadd.f32 %v276, %v694
    %v697 = vtanh.pop %v696
    %v698 = vsub.f32 1.0, %v687
    %700 = vrot.lane.b32.xlu0 %v697, 96
    %v701 = vpop.permute.xlu0 %700
    %v703 = vmul.f32 %v698, %v701
    %v704 = vrot.slane %v601, 7
    %v706 = vmul.f32 %v687, %v704
    %v707 = vadd.f32 %v703, %v706
    %v709 = vrot.slane %v707, 3
    %710 = vrot.lane.b32.xlu0 %v709, 96
    %v711 = vpop.permute.xlu0 %710
    %v712 = vsel %vm205, %v711, 0
    %714 = vmatprep.subr.mxu0 0.0
    %715 = vmatpush1.msra.mxu0 0.0
    %716 = vmatprep.subr.mxu0 0.0
    %717 = vmatpush1.msra.mxu0 0.0
    %718 = vmatprep.subr.mxu0 0.0
    %719 = vmatpush1.msra.mxu0 0.0
    %720 = vmatprep.subr.mxu0 0.0
    %721 = vmatpush1.msra.mxu0 0.0
    %722 = vmatprep.subr.mxu0 0.0
    %723 = vmatpush1.msra.mxu0 0.0
    %724 = vmatprep.subr.mxu0 0.0
    %725 = vmatpush1.msra.mxu0 0.0
    %726 = vmatprep.subr.mxu0 0.0
    %727 = vmatpush1.msra.mxu0 0.0
    %728 = vmatprep.subr.mxu0 0.0
    %729 = vmatpush1.msra.mxu0 0.0
    %730 = vmatprep.subr.mxu0 0.0
    %731 = vmatpush1.msra.mxu0 0.0
    %732 = vmatprep.subr.mxu0 0.0
    %733 = vmatpush1.msra.mxu0 0.0
    %734 = vmatprep.subr.mxu0 0.0
    %735 = vmatpush1.msra.mxu0 0.0
    %736 = vmatprep.subr.mxu0 0.0
    %737 = vmatpush1.msra.mxu0 0.0
    %738 = vmatprep.subr.mxu0 0.0
    %739 = vmatpush1.msra.mxu0 %v282
    %740 = vmatprep.subr.mxu0 0.0
    %741 = vmatpush1.msra.mxu0 %v281
    %742 = vmatprep.subr.mxu0 0.0
    %743 = vmatpush1.msra.mxu0 %v280
    %744 = vmatprep.subr.mxu0 0.0
    %745 = vmatpush1.msra.mxu0 %v279
    %746 = vmatprep.subr.mxu0 0.0
    %747 = vmatpush2.msra.mxu0 0.0
    %748 = vmatprep.subr.mxu0 0.0
    %749 = vmatpush2.msra.mxu0 0.0
    %750 = vmatprep.subr.mxu0 0.0
    %751 = vmatpush2.msra.mxu0 0.0
    %752 = vmatprep.subr.mxu0 0.0
    %753 = vmatpush2.msra.mxu0 0.0
    %754 = vmatprep.subr.mxu0 0.0
    %755 = vmatpush2.msra.mxu0 0.0
    %756 = vmatprep.subr.mxu0 0.0
    %757 = vmatpush2.msra.mxu0 0.0
    %758 = vmatprep.subr.mxu0 0.0
    %759 = vmatpush2.msra.mxu0 0.0
    %760 = vmatprep.subr.mxu0 0.0
    %761 = vmatpush2.msra.mxu0 0.0
    %762 = vmatprep.subr.mxu0 0.0
    %763 = vmatpush2.msra.mxu0 0.0
    %764 = vmatprep.subr.mxu0 0.0
    %765 = vmatpush2.msra.mxu0 0.0
    %766 = vmatprep.subr.mxu0 0.0
    %767 = vmatpush2.msra.mxu0 0.0
    %768 = vmatprep.subr.mxu0 0.0
    %769 = vmatpush2.msra.mxu0 0.0
    %770 = vmatprep.subr.mxu0 0.0
    %771 = vmatpush2.msra.mxu0 0.0
    %772 = vmatprep.subr.mxu0 0.0
    %773 = vmatpush2.msra.mxu0 0.0
    %774 = vmatprep.subr.mxu0 0.0
    %775 = vmatpush2.msra.mxu0 0.0
    %776 = vmatprep.subr.mxu0 0.0
    %777 = vmatpush2.msra.mxu0 0.0
    %778 = vmatprep.mubr.f32.mxu0 0.0
    %779 = vmatmul.mubr.f32.gmra.mxu0 %v712
    %v780 = vpop.f32.mrf.mxu0
    %v781 = vadd.f32 %v283, %v780
    %v782 = vpop.f32.mrf.mxu0
    %783 = vdwg.mxu0
    %v785 = vrot.slane %v781, 4
    %v787 = vadd.f32 %v276, %v785
    %v788 = vxor.u32 %v787, 2147483648
    %v789 = vmul.f32 %v788, 1.442695
    %v790 = vpow.pop %v789
    %v791 = vadd.f32 %v790, 1.0
    %v792 = vrcp.pop %v791
    %v793 = vmul.f32 1.0, %v792
    %794 = vrot.lane.b32.xlu0 %v785, 64
    %v795 = vpop.permute.xlu0 %794
    %v797 = vmul.f32 %v793, %v795
    %799 = vrot.lane.b32.xlu0 %v797, 64
    %v800 = vpop.permute.xlu0 %799
    %v802 = vadd.f32 %v276, %v800
    %v803 = vtanh.pop %v802
    %v804 = vsub.f32 1.0, %v793
    %806 = vrot.lane.b32.xlu0 %v803, 96
    %v807 = vpop.permute.xlu0 %806
    %v809 = vmul.f32 %v804, %v807
    %v810 = vrot.slane %v707, 7
    %v812 = vmul.f32 %v793, %v810
    %v813 = vadd.f32 %v809, %v812
    %v815 = vrot.slane %v813, 4
    %816 = vrot.lane.b32.xlu0 %v815, 96
    %v817 = vpop.permute.xlu0 %816
    %v818 = vsel %vm205, %v817, 0
    %820 = vmatprep.subr.mxu0 0.0
    %821 = vmatpush1.msra.mxu0 0.0
    %822 = vmatprep.subr.mxu0 0.0
    %823 = vmatpush1.msra.mxu0 0.0
    %824 = vmatprep.subr.mxu0 0.0
    %825 = vmatpush1.msra.mxu0 0.0
    %826 = vmatprep.subr.mxu0 0.0
    %827 = vmatpush1.msra.mxu0 0.0
    %828 = vmatprep.subr.mxu0 0.0
    %829 = vmatpush1.msra.mxu0 0.0
    %830 = vmatprep.subr.mxu0 0.0
    %831 = vmatpush1.msra.mxu0 0.0
    %832 = vmatprep.subr.mxu0 0.0
    %833 = vmatpush1.msra.mxu0 0.0
    %834 = vmatprep.subr.mxu0 0.0
    %835 = vmatpush1.msra.mxu0 0.0
    %836 = vmatprep.subr.mxu0 0.0
    %837 = vmatpush1.msra.mxu0 0.0
    %838 = vmatprep.subr.mxu0 0.0
    %839 = vmatpush1.msra.mxu0 0.0
    %840 = vmatprep.subr.mxu0 0.0
    %841 = vmatpush1.msra.mxu0 0.0
    %842 = vmatprep.subr.mxu0 0.0
    %843 = vmatpush1.msra.mxu0 0.0
    %844 = vmatprep.subr.mxu0 0.0
    %845 = vmatpush1.msra.mxu0 %v282
    %846 = vmatprep.subr.mxu0 0.0
    %847 = vmatpush1.msra.mxu0 %v281
    %848 = vmatprep.subr.mxu0 0.0
    %849 = vmatpush1.msra.mxu0 %v280
    %850 = vmatprep.subr.mxu0 0.0
    %851 = vmatpush1.msra.mxu0 %v279
    %852 = vmatprep.subr.mxu0 0.0
    %853 = vmatpush2.msra.mxu0 0.0
    %854 = vmatprep.subr.mxu0 0.0
    %855 = vmatpush2.msra.mxu0 0.0
    %856 = vmatprep.subr.mxu0 0.0
    %857 = vmatpush2.msra.mxu0 0.0
    %858 = vmatprep.subr.mxu0 0.0
    %859 = vmatpush2.msra.mxu0 0.0
    %860 = vmatprep.subr.mxu0 0.0
    %861 = vmatpush2.msra.mxu0 0.0
    %862 = vmatprep.subr.mxu0 0.0
    %863 = vmatpush2.msra.mxu0 0.0
    %864 = vmatprep.subr.mxu0 0.0
    %865 = vmatpush2.msra.mxu0 0.0
    %866 = vmatprep.subr.mxu0 0.0
    %867 = vmatpush2.msra.mxu0 0.0
    %868 = vmatprep.subr.mxu0 0.0
    %869 = vmatpush2.msra.mxu0 0.0
    %870 = vmatprep.subr.mxu0 0.0
    %871 = vmatpush2.msra.mxu0 0.0
    %872 = vmatprep.subr.mxu0 0.0
    %873 = vmatpush2.msra.mxu0 0.0
    %874 = vmatprep.subr.mxu0 0.0
    %875 = vmatpush2.msra.mxu0 0.0
    %876 = vmatprep.subr.mxu0 0.0
    %877 = vmatpush2.msra.mxu0 0.0
    %878 = vmatprep.subr.mxu0 0.0
    %879 = vmatpush2.msra.mxu0 0.0
    %880 = vmatprep.subr.mxu0 0.0
    %881 = vmatpush2.msra.mxu0 0.0
    %882 = vmatprep.subr.mxu0 0.0
    %883 = vmatpush2.msra.mxu0 0.0
    %884 = vmatprep.mubr.f32.mxu0 0.0
    %885 = vmatmul.mubr.f32.gmra.mxu0 %v818
    %v886 = vpop.f32.mrf.mxu0
    %v887 = vadd.f32 %v283, %v886
    %v888 = vpop.f32.mrf.mxu0
    %889 = vdwg.mxu0
    %v891 = vrot.slane %v887, 3
    %v893 = vadd.f32 %v276, %v891
    %v894 = vxor.u32 %v893, 2147483648
    %v895 = vmul.f32 %v894, 1.442695
    %v896 = vpow.pop %v895
    %v897 = vadd.f32 %v896, 1.0
    %v898 = vrcp.pop %v897
    %v899 = vmul.f32 1.0, %v898
    %900 = vrot.lane.b32.xlu0 %v891, 64
    %v901 = vpop.permute.xlu0 %900
    %v903 = vmul.f32 %v899, %v901
    %905 = vrot.lane.b32.xlu0 %v903, 64
    %v906 = vpop.permute.xlu0 %905
    %v908 = vadd.f32 %v276, %v906
    %v909 = vtanh.pop %v908
    %v910 = vsub.f32 1.0, %v899
    %912 = vrot.lane.b32.xlu0 %v909, 96
    %v913 = vpop.permute.xlu0 %912
    %v915 = vmul.f32 %v910, %v913
    %v916 = vrot.slane %v813, 7
    %v918 = vmul.f32 %v899, %v916
    %v919 = vadd.f32 %v915, %v918
    %v921 = vrot.slane %v919, 5
    %922 = vrot.lane.b32.xlu0 %v921, 96
    %v923 = vpop.permute.xlu0 %922
    %v924 = vsel %vm205, %v923, 0
    %926 = vmatprep.subr.mxu0 0.0
    %927 = vmatpush1.msra.mxu0 0.0
    %928 = vmatprep.subr.mxu0 0.0
    %929 = vmatpush1.msra.mxu0 0.0
    %930 = vmatprep.subr.mxu0 0.0
    %931 = vmatpush1.msra.mxu0 0.0
    %932 = vmatprep.subr.mxu0 0.0
    %933 = vmatpush1.msra.mxu0 0.0
    %934 = vmatprep.subr.mxu0 0.0
    %935 = vmatpush1.msra.mxu0 0.0
    %936 = vmatprep.subr.mxu0 0.0
    %937 = vmatpush1.msra.mxu0 0.0
    %938 = vmatprep.subr.mxu0 0.0
    %939 = vmatpush1.msra.mxu0 0.0
    %940 = vmatprep.subr.mxu0 0.0
    %941 = vmatpush1.msra.mxu0 0.0
    %942 = vmatprep.subr.mxu0 0.0
    %943 = vmatpush1.msra.mxu0 0.0
    %944 = vmatprep.subr.mxu0 0.0
    %945 = vmatpush1.msra.mxu0 0.0
    %946 = vmatprep.subr.mxu0 0.0
    %947 = vmatpush1.msra.mxu0 0.0
    %948 = vmatprep.subr.mxu0 0.0
    %949 = vmatpush1.msra.mxu0 0.0
    %950 = vmatprep.subr.mxu0 0.0
    %951 = vmatpush1.msra.mxu0 %v282
    %952 = vmatprep.subr.mxu0 0.0
    %953 = vmatpush1.msra.mxu0 %v281
    %954 = vmatprep.subr.mxu0 0.0
    %955 = vmatpush1.msra.mxu0 %v280
    %956 = vmatprep.subr.mxu0 0.0
    %957 = vmatpush1.msra.mxu0 %v279
    %958 = vmatprep.subr.mxu0 0.0
    %959 = vmatpush2.msra.mxu0 0.0
    %960 = vmatprep.subr.mxu0 0.0
    %961 = vmatpush2.msra.mxu0 0.0
    %962 = vmatprep.subr.mxu0 0.0
    %963 = vmatpush2.msra.mxu0 0.0
    %964 = vmatprep.subr.mxu0 0.0
    %965 = vmatpush2.msra.mxu0 0.0
    %966 = vmatprep.subr.mxu0 0.0
    %967 = vmatpush2.msra.mxu0 0.0
    %968 = vmatprep.subr.mxu0 0.0
    %969 = vmatpush2.msra.mxu0 0.0
    %970 = vmatprep.subr.mxu0 0.0
    %971 = vmatpush2.msra.mxu0 0.0
    %972 = vmatprep.subr.mxu0 0.0
    %973 = vmatpush2.msra.mxu0 0.0
    %974 = vmatprep.subr.mxu0 0.0
    %975 = vmatpush2.msra.mxu0 0.0
    %976 = vmatprep.subr.mxu0 0.0
    %977 = vmatpush2.msra.mxu0 0.0
    %978 = vmatprep.subr.mxu0 0.0
    %979 = vmatpush2.msra.mxu0 0.0
    %980 = vmatprep.subr.mxu0 0.0
    %981 = vmatpush2.msra.mxu0 0.0
    %982 = vmatprep.subr.mxu0 0.0
    %983 = vmatpush2.msra.mxu0 0.0
    %984 = vmatprep.subr.mxu0 0.0
    %985 = vmatpush2.msra.mxu0 0.0
    %986 = vmatprep.subr.mxu0 0.0
    %987 = vmatpush2.msra.mxu0 0.0
    %988 = vmatprep.subr.mxu0 0.0
    %989 = vmatpush2.msra.mxu0 0.0
    %990 = vmatprep.mubr.f32.mxu0 0.0
    %991 = vmatmul.mubr.f32.gmra.mxu0 %v924
    %v992 = vpop.f32.mrf.mxu0
    %v993 = vadd.f32 %v283, %v992
    %v994 = vpop.f32.mrf.mxu0
    %995 = vdwg.mxu0
    %v997 = vrot.slane %v993, 2
    %v999 = vadd.f32 %v276, %v997
    %v1000 = vxor.u32 %v999, 2147483648
    %v1001 = vmul.f32 %v1000, 1.442695
    %v1002 = vpow.pop %v1001
    %v1003 = vadd.f32 %v1002, 1.0
    %v1004 = vrcp.pop %v1003
    %v1005 = vmul.f32 1.0, %v1004
    %1006 = vrot.lane.b32.xlu0 %v997, 64
    %v1007 = vpop.permute.xlu0 %1006
    %v1009 = vmul.f32 %v1005, %v1007
    %1011 = vrot.lane.b32.xlu0 %v1009, 64
    %v1012 = vpop.permute.xlu0 %1011
    %v1014 = vadd.f32 %v276, %v1012
    %v1015 = vtanh.pop %v1014
    %v1016 = vsub.f32 1.0, %v1005
    %1018 = vrot.lane.b32.xlu0 %v1015, 96
    %v1019 = vpop.permute.xlu0 %1018
    %v1021 = vmul.f32 %v1016, %v1019
    %v1022 = vrot.slane %v919, 7
    %v1024 = vmul.f32 %v1005, %v1022
    %v1025 = vadd.f32 %v1021, %v1024
    %v1027 = vrot.slane %v1025, 6
    %1028 = vrot.lane.b32.xlu0 %v1027, 96
    %v1029 = vpop.permute.xlu0 %1028
    %v1030 = vsel %vm205, %v1029, 0
    %1032 = vmatprep.subr.mxu0 0.0
    %1033 = vmatpush1.msra.mxu0 0.0
    %1034 = vmatprep.subr.mxu0 0.0
    %1035 = vmatpush1.msra.mxu0 0.0
    %1036 = vmatprep.subr.mxu0 0.0
    %1037 = vmatpush1.msra.mxu0 0.0
    %1038 = vmatprep.subr.mxu0 0.0
    %1039 = vmatpush1.msra.mxu0 0.0
    %1040 = vmatprep.subr.mxu0 0.0
    %1041 = vmatpush1.msra.mxu0 0.0
    %1042 = vmatprep.subr.mxu0 0.0
    %1043 = vmatpush1.msra.mxu0 0.0
    %1044 = vmatprep.subr.mxu0 0.0
    %1045 = vmatpush1.msra.mxu0 0.0
    %1046 = vmatprep.subr.mxu0 0.0
    %1047 = vmatpush1.msra.mxu0 0.0
    %1048 = vmatprep.subr.mxu0 0.0
    %1049 = vmatpush1.msra.mxu0 0.0
    %1050 = vmatprep.subr.mxu0 0.0
    %1051 = vmatpush1.msra.mxu0 0.0
    %1052 = vmatprep.subr.mxu0 0.0
    %1053 = vmatpush1.msra.mxu0 0.0
    %1054 = vmatprep.subr.mxu0 0.0
    %1055 = vmatpush1.msra.mxu0 0.0
    %1056 = vmatprep.subr.mxu0 0.0
    %1057 = vmatpush1.msra.mxu0 %v282
    %1058 = vmatprep.subr.mxu0 0.0
    %1059 = vmatpush1.msra.mxu0 %v281
    %1060 = vmatprep.subr.mxu0 0.0
    %1061 = vmatpush1.msra.mxu0 %v280
    %1062 = vmatprep.subr.mxu0 0.0
    %1063 = vmatpush1.msra.mxu0 %v279
    %1064 = vmatprep.subr.mxu0 0.0
    %1065 = vmatpush2.msra.mxu0 0.0
    %1066 = vmatprep.subr.mxu0 0.0
    %1067 = vmatpush2.msra.mxu0 0.0
    %1068 = vmatprep.subr.mxu0 0.0
    %1069 = vmatpush2.msra.mxu0 0.0
    %1070 = vmatprep.subr.mxu0 0.0
    %1071 = vmatpush2.msra.mxu0 0.0
    %1072 = vmatprep.subr.mxu0 0.0
    %1073 = vmatpush2.msra.mxu0 0.0
    %1074 = vmatprep.subr.mxu0 0.0
    %1075 = vmatpush2.msra.mxu0 0.0
    %1076 = vmatprep.subr.mxu0 0.0
    %1077 = vmatpush2.msra.mxu0 0.0
    %1078 = vmatprep.subr.mxu0 0.0
    %1079 = vmatpush2.msra.mxu0 0.0
    %1080 = vmatprep.subr.mxu0 0.0
    %1081 = vmatpush2.msra.mxu0 0.0
    %1082 = vmatprep.subr.mxu0 0.0
    %1083 = vmatpush2.msra.mxu0 0.0
    %1084 = vmatprep.subr.mxu0 0.0
    %1085 = vmatpush2.msra.mxu0 0.0
    %1086 = vmatprep.subr.mxu0 0.0
    %1087 = vmatpush2.msra.mxu0 0.0
    %1088 = vmatprep.subr.mxu0 0.0
    %1089 = vmatpush2.msra.mxu0 0.0
    %1090 = vmatprep.subr.mxu0 0.0
    %1091 = vmatpush2.msra.mxu0 0.0
    %1092 = vmatprep.subr.mxu0 0.0
    %1093 = vmatpush2.msra.mxu0 0.0
    %1094 = vmatprep.subr.mxu0 0.0
    %1095 = vmatpush2.msra.mxu0 0.0
    %1096 = vmatprep.mubr.f32.mxu0 0.0
    %1097 = vmatmul.mubr.f32.gmra.mxu0 %v1030
    %v1098 = vpop.f32.mrf.mxu0
    %v1099 = vadd.f32 %v283, %v1098
    %v1100 = vpop.f32.mrf.mxu0
    %1101 = vdwg.mxu0
    %v1103 = vrot.slane %v1099, 1
    %v1105 = vadd.f32 %v276, %v1103
    %v1106 = vxor.u32 %v1105, 2147483648
    %v1107 = vmul.f32 %v1106, 1.442695
    %v1108 = vpow.pop %v1107
    %v1109 = vadd.f32 %v1108, 1.0
    %v1110 = vrcp.pop %v1109
    %v1111 = vmul.f32 1.0, %v1110
    %1112 = vrot.lane.b32.xlu0 %v1103, 64
    %v1113 = vpop.permute.xlu0 %1112
    %v1115 = vmul.f32 %v1111, %v1113
    %1117 = vrot.lane.b32.xlu0 %v1115, 64
    %v1118 = vpop.permute.xlu0 %1117
    %v1120 = vadd.f32 %v276, %v1118
    %v1121 = vtanh.pop %v1120
    %v1122 = vsub.f32 1.0, %v1111
    %1124 = vrot.lane.b32.xlu0 %v1121, 96
    %v1125 = vpop.permute.xlu0 %1124
    %v1127 = vmul.f32 %v1122, %v1125
    %v1128 = vrot.slane %v1025, 7
    %v1130 = vmul.f32 %v1111, %v1128
    %v1131 = vadd.f32 %v1127, %v1130
    %v1132 = vld [vmem:[%s6 + $0x3] sm:$0x1]
    %v1133 = vld [vmem:[#allocation8] sm:$0xff]
    %v1134 = vld [vmem:[#allocation8 + $0x8] sm:$0xff]
    %v1135 = vld [vmem:[#allocation8 + $0x10] sm:$0xff]
    %v1136 = vld [vmem:[#allocation8 + $0x18] sm:$0xff]
    %v1138 = vrot.slane %v1131, 7
    %1139 = vrot.lane.b32.xlu0 %v1138, 96
    %v1140 = vpop.permute.xlu0 %1139
    %v1141 = vsel %vm205, %v1140, 0
    %1143 = vmatprep.subr.mxu0 0.0
    %1144 = vmatpush1.msra.mxu0 0.0
    %1145 = vmatprep.subr.mxu0 0.0
    %1146 = vmatpush1.msra.mxu0 0.0
    %1147 = vmatprep.subr.mxu0 0.0
    %1148 = vmatpush1.msra.mxu0 0.0
    %1149 = vmatprep.subr.mxu0 0.0
    %1150 = vmatpush1.msra.mxu0 0.0
    %1151 = vmatprep.subr.mxu0 0.0
    %1152 = vmatpush1.msra.mxu0 0.0
    %1153 = vmatprep.subr.mxu0 0.0
    %1154 = vmatpush1.msra.mxu0 0.0
    %1155 = vmatprep.subr.mxu0 0.0
    %1156 = vmatpush1.msra.mxu0 0.0
    %1157 = vmatprep.subr.mxu0 0.0
    %1158 = vmatpush1.msra.mxu0 0.0
    %1159 = vmatprep.subr.mxu0 0.0
    %1160 = vmatpush1.msra.mxu0 0.0
    %1161 = vmatprep.subr.mxu0 0.0
    %1162 = vmatpush1.msra.mxu0 0.0
    %1163 = vmatprep.subr.mxu0 0.0
    %1164 = vmatpush1.msra.mxu0 0.0
    %1165 = vmatprep.subr.mxu0 0.0
    %1166 = vmatpush1.msra.mxu0 0.0
    %1167 = vmatprep.subr.mxu0 0.0
    %1168 = vmatpush1.msra.mxu0 %v1136
    %1169 = vmatprep.subr.mxu0 0.0
    %1170 = vmatpush1.msra.mxu0 %v1135
    %1171 = vmatprep.subr.mxu0 0.0
    %1172 = vmatpush1.msra.mxu0 %v1134
    %1173 = vmatprep.subr.mxu0 0.0
    %1174 = vmatpush1.msra.mxu0 %v1133
    %1175 = vmatprep.subr.mxu0 0.0
    %1176 = vmatpush2.msra.mxu0 0.0
    %1177 = vmatprep.subr.mxu0 0.0
    %1178 = vmatpush2.msra.mxu0 0.0
    %1179 = vmatprep.subr.mxu0 0.0
    %1180 = vmatpush2.msra.mxu0 0.0
    %1181 = vmatprep.subr.mxu0 0.0
    %1182 = vmatpush2.msra.mxu0 0.0
    %1183 = vmatprep.subr.mxu0 0.0
    %1184 = vmatpush2.msra.mxu0 0.0
    %1185 = vmatprep.subr.mxu0 0.0
    %1186 = vmatpush2.msra.mxu0 0.0
    %1187 = vmatprep.subr.mxu0 0.0
    %1188 = vmatpush2.msra.mxu0 0.0
    %1189 = vmatprep.subr.mxu0 0.0
    %1190 = vmatpush2.msra.mxu0 0.0
    %1191 = vmatprep.subr.mxu0 0.0
    %1192 = vmatpush2.msra.mxu0 0.0
    %1193 = vmatprep.subr.mxu0 0.0
    %1194 = vmatpush2.msra.mxu0 0.0
    %1195 = vmatprep.subr.mxu0 0.0
    %1196 = vmatpush2.msra.mxu0 0.0
    %1197 = vmatprep.subr.mxu0 0.0
    %1198 = vmatpush2.msra.mxu0 0.0
    %1199 = vmatprep.subr.mxu0 0.0
    %1200 = vmatpush2.msra.mxu0 0.0
    %1201 = vmatprep.subr.mxu0 0.0
    %1202 = vmatpush2.msra.mxu0 0.0
    %1203 = vmatprep.subr.mxu0 0.0
    %1204 = vmatpush2.msra.mxu0 0.0
    %1205 = vmatprep.subr.mxu0 0.0
    %1206 = vmatpush2.msra.mxu0 0.0
    %1207 = vmatprep.mubr.f32.mxu0 0.0
    %1208 = vmatmul.mubr.f32.gmra.mxu0 %v1141
    %v1209 = vpop.f32.mrf.mxu0
    %v1210 = vadd.f32 %v1132, %v1209
    %v1211 = vpop.f32.mrf.mxu0
    %1212 = vdwg.mxu0
    %1213 = vst [vmem:[#allocation10] sm:$0x1] %v1210
    // Predicated region
    $region50: #{tpu_custom_call.1} parent=1 // pred_check
      _
    $region51: #{tpu_custom_call.1} parent=1 // pred_check_branch
      %1215 = sbr.rel (0) target = $region53
    $region52: #{tpu_custom_call.1} parent=1 // pred_region
      %s1217 = ssub.s32 16, 16
      %1218 = vsyncadd [#allocation4], %s1217
      %s1220 = sshll.u32 [#allocation10], 4
      %s1221 = int_to_ptr.vmem [resolvable:$true] %s1220
      %1223 = dma.vmem_to_hbm [thread:$0]  %s1221, 16, %s8, [#allocation4]
    $region53: #{tpu_custom_call.1} parent=1 // pred_fallthru
      _
    // Predicated region
    $region54: #{tpu_custom_call.1} parent=1 // pred_check
      _
    $region55: #{tpu_custom_call.1} parent=1 // pred_check_branch
      %1225 = sbr.rel (0) target = $region57
    $region56: #{tpu_custom_call.1} parent=1 // pred_region
      %1226 = dma.done [#allocation4], 16
    $region57: #{tpu_custom_call.1} parent=1 // pred_fallthru
      _
    %1227 = vsyncpa [#allocation3], 1
    %1228 = vsyncpa [#allocation6], 1
    %1229 = vsyncpa [#allocation9], 1
    %1230 = vsyncpa [#allocation4], 1

</llo_original>
